<compile_context>
chip_gen: v7x
topology: tpu7x:2x2x1
jax: 0.10.0
libtpu: 0.0.40
codegen_flags: <defaults>
</compile_context>

<pallas_src>
from functools import partial

import jax
import jax.numpy as jnp
from jax import lax
from jax.experimental import pallas as pl
from jax.experimental.pallas import tpu as pltpu

# ---------------- synthetic config (small, consistent with the module) ------
T = 8                      # num_tokens (sequence length)
H = 128                    # hidden_size
NH = 4                     # num_attention_heads
NKV = 2                    # num_key_value_heads
D = H // NH                # head_dim = 32 (also rotary_dim)
GROUPS = NH // NKV         # key_value_groups
I = 256                    # intermediate_size
EPS = 1e-6                 # rms_norm_eps
ROPE_THETA = 10000.0
ALPHA = 4.0                # rope_scaling['alpha']
MAX_POS = 64               # config.max_position_embeddings
MROPE_FRAC = [0.25, 0.25, 0.25, 0.25]   # rope_scaling['mrope_section']
QKV_OUT = (NH + 2 * NKV) * D            # qkv_proj output dim (256)
SCALING = D ** -0.5


# ---------------- XDRope cos/sin (glue, plain JAX) ---------------------------
def compute_xdrope_cos_sin(positions):
    """positions: int32 [4, T] -> (cos, sin) each float32 [T, D]."""
    mrope_section = [int(f * D // 2) for f in MROPE_FRAC]      # e.g. [4,4,4,4]
    max_pos = MAX_POS // 4
    max_len = int(max_pos * ALPHA)
    base = ROPE_THETA * ALPHA ** (D / (D - 2))
    inv_freq = 1.0 / base ** (jnp.arange(0, D, 2, dtype=jnp.float32) / D)
    t = jnp.arange(max_len, dtype=jnp.float32)
    freqs = jnp.einsum("i,j->ij", t, inv_freq)
    freqs = jnp.concatenate([freqs, freqs], axis=-1)            # [max_len, D]
    cache = jnp.concatenate([jnp.cos(freqs), jnp.sin(freqs)], axis=-1)

    cos_sin = cache[positions]                                  # [4, T, 2D]
    cos, sin = jnp.split(cos_sin, 2, axis=-1)                   # [4, T, D]
    cos = jnp.transpose(cos, (1, 0, 2))                         # [T, 4, D]
    sin = jnp.transpose(sin, (1, 0, 2))
    xdrope_section = mrope_section * 2                          # sums to D

    def select(m):
        parts, off = [], 0
        for i, sz in enumerate(xdrope_section):
            parts.append(m[:, i % 4, off:off + sz])
            off += sz
        return jnp.concatenate(parts, axis=-1)                  # [T, D]

    return select(cos), select(sin)


# ---------------- Pallas kernel ----------------------------------------------
def decoder_layer_kernel(*refs, has_residual):
    f32 = jnp.float32
    bf16 = jnp.bfloat16

    if has_residual:
        (hidden_ref, residual_ref, cos_ref, sin_ref, w_qkv_ref, qw_ref, kw_ref,
         w_o_ref, w_gu_ref, w_dn_ref, ln_in_ref, ln_post_ref,
         out_h_ref, out_res_ref) = refs
    else:
        (hidden_ref, cos_ref, sin_ref, w_qkv_ref, qw_ref, kw_ref,
         w_o_ref, w_gu_ref, w_dn_ref, ln_in_ref, ln_post_ref,
         out_h_ref, out_res_ref) = refs
        residual_ref = None

    TP = hidden_ref.shape[0]          # token count, rounded up to multiple of 8
    W = w_qkv_ref.shape[1]            # (NH + 2*NKV) * D

    def rmsnorm(x, w):                # f32 statistics (v5e-friendly)
        var = jnp.mean(x * x, axis=-1, keepdims=True)
        return x * lax.rsqrt(var + EPS) * w

    hidden = hidden_ref[...].astype(f32)
    if has_residual:
        h = hidden + residual_ref[...]        # fused-add RMSNorm path
    else:
        h = hidden                            # residual-is-None path (no add)
    normed = rmsnorm(h, ln_in_ref[...])

    # ---- fused QKV projection (head-major columns: q heads | k heads | v) ---
    qkv = jnp.dot(normed.astype(bf16), w_qkv_ref[...],
                  preferred_element_type=f32)                    # [TP, W]

    # ---- XDRope on the whole q|k slab (v lanes carry cos=1, sin=0) ----------
    # Per-lane cos/sin tables are built in VMEM from the [TP, D] inputs (no
    # tiled [TP, W] tables round-tripping through HBM).  rotate_half within
    # each D-wide head block uses two XLU rolls + a sign select.
    cosD = cos_ref[...]                                           # [TP, D]
    sinD = sin_ref[...]
    cos_full = jnp.concatenate([cosD] * (NH + NKV)
                               + [jnp.ones((TP, NKV * D), f32)], axis=-1)
    sin_full = jnp.concatenate([sinD] * (NH + NKV)
                               + [jnp.zeros((TP, NKV * D), f32)], axis=-1)

    lane = lax.broadcasted_iota(jnp.int32, (TP, W), 1)
    first_half = (lane % D) < (D // 2)
    r_fwd = pltpu.roll(qkv, shift=D // 2, axis=1)       # x[(j - D/2) mod W]
    r_bwd = pltpu.roll(qkv, shift=W - D // 2, axis=1)   # x[(j + D/2) mod W]
    rot = jnp.where(first_half, -r_bwd, r_fwd)
    roped = qkv * cos_full + rot * sin_full             # v lanes pass through

    # ---- causal GQA attention (rope-then-norm, as in the module) ------------
    # Per-head QK RMSNorm is an in-vreg reduce (mean over the D-wide slice),
    # not an MXU pool matmul.  Head outputs are collected lane-contiguously
    # and o_proj is ONE matmul with K = NH*D.
    # NOTE: strictly-causal mask keeps any zero-padded tail keys out of real
    # query rows (padded keys sit after the real tokens).
    row = lax.broadcasted_iota(jnp.int32, (TP, TP), 0)
    col = lax.broadcasted_iota(jnp.int32, (TP, TP), 1)
    causal = row >= col
    neg_inf = jnp.float32(-1e30)

    qw = qw_ref[...]                  # [1, D]
    kw = kw_ref[...]

    # TODO(synk): at production NH, turn this into lax.fori_loop over a
    # head-major [NH, TP, D] VMEM scratch to bound live ranges and code size.
    head_outs = []
    for g in range(NKV):
        k_h = rmsnorm(roped[:, (NH + g) * D:(NH + g + 1) * D], kw).astype(bf16)
        v_h = roped[:, (NH + NKV + g) * D:(NH + NKV + g + 1) * D].astype(bf16)
        for j in range(GROUPS):
            hd = g * GROUPS + j
            q_h = rmsnorm(roped[:, hd * D:(hd + 1) * D], qw).astype(bf16)
            s = lax.dot_general(q_h, k_h, (((1,), (1,)), ((), ())),
                                preferred_element_type=f32) * SCALING   # [TP,TP]
            s = jnp.where(causal, s, neg_inf)
            m = jnp.max(s, axis=-1, keepdims=True)
            p = jnp.exp(s - m)
            denom = jnp.sum(p, axis=-1, keepdims=True)
            pv = jnp.dot(p.astype(bf16), v_h, preferred_element_type=f32)
            head_outs.append(pv / denom)          # normalize AFTER PV ([TP,D])

    attn_slab = jnp.concatenate(head_outs, axis=-1).astype(bf16)   # [TP, NH*D]
    attn = jnp.dot(attn_slab, w_o_ref[...], preferred_element_type=f32)

    # ---- post-attention fused-add RMSNorm + MLP ------------------------------
    h2 = attn + h
    out_res_ref[...] = h2
    normed2 = rmsnorm(h2, ln_post_ref[...])

    gu = jnp.dot(normed2.astype(bf16), w_gu_ref[...],
                 preferred_element_type=f32)                     # [TP, 2I]
    gate = gu[:, :I]                    # lane-aligned slices (I = 256)
    up = gu[:, I:]
    act = gate * jax.nn.sigmoid(gate) * up
    out_h_ref[...] = jnp.dot(act.astype(bf16), w_dn_ref[...],
                             preferred_element_type=f32).astype(out_h_ref.dtype)


# ---------------- one-time weight preprocessing (glue) ------------------------
def prepare_params(raw):
    """De-interleave / bf16-cast the module weights for the kernel."""
    bf16 = jnp.bfloat16
    w = raw["w_qkv"]                                   # [H, QKV_OUT] interleaved
    stride = (GROUPS + 2) * D
    wq, wk, wv = [], [], []
    for g in range(NKV):
        base = g * stride
        for j in range(GROUPS):
            wq.append(w[:, base + j * D: base + (j + 1) * D])
        wk.append(w[:, base + GROUPS * D: base + (GROUPS + 1) * D])
        wv.append(w[:, base + (GROUPS + 1) * D: base + (GROUPS + 2) * D])
    w_qkv_r = jnp.concatenate(wq + wk + wv, axis=-1).astype(bf16)

    return {
        "w_qkv_r": w_qkv_r,
        "q_norm_w": raw["q_norm_w"].astype(jnp.float32),   # [1, D]
        "k_norm_w": raw["k_norm_w"].astype(jnp.float32),   # [1, D]
        "w_o": raw["w_o"].astype(bf16),                    # [NH*D, H]
        "w_gu": raw["w_gate_up"].astype(bf16),
        "w_dn": raw["w_down"].astype(bf16),
        "ln_in_w": raw["ln_in_w"].astype(jnp.float32),
        "ln_post_w": raw["ln_post_w"].astype(jnp.float32),
    }


# ---------------- wrapper ------------------------------------------------------
def hunyuan_decoder_layer(hidden, residual, positions, p):
    """Forward of HunYuanDecoderLayer. Returns (hidden_out bf16, residual_out f32)."""
    t = hidden.shape[0]
    tp = pl.cdiv(t, 8) * 8            # sublane-aligned rows only (no 128 pad)
    pad = tp - t

    cos, sin = compute_xdrope_cos_sin(positions)      # [t, D] f32
    if pad:
        hidden = jnp.pad(hidden, ((0, pad), (0, 0)))
        if residual is not None:
            residual = jnp.pad(residual, ((0, pad), (0, 0)))
        cos = jnp.pad(cos, ((0, pad), (0, 0)))
        sin = jnp.pad(sin, ((0, pad), (0, 0)))

    has_residual = residual is not None
    inputs = [hidden]
    if has_residual:
        inputs.append(residual)
    inputs += [cos, sin, p["w_qkv_r"], p["q_norm_w"], p["k_norm_w"], p["w_o"],
               p["w_gu"], p["w_dn"], p["ln_in_w"], p["ln_post_w"]]

    # advisory cost estimate for XLA's scheduler
    in_bytes = sum(int(x.size) * x.dtype.itemsize for x in inputs)
    out_bytes = tp * H * (2 + 4)
    flops = (2 * tp * H * QKV_OUT                  # qkv proj
             + NH * 4 * tp * tp * D                # scores + PV
             + 2 * tp * (NH * D) * H               # single o_proj
             + 2 * tp * H * (2 * I) + 2 * tp * I * H)   # MLP
    transc = NH * tp * tp + tp * I + (2 + NH + NKV) * tp   # exp + sigmoid + rsqrt

    vmem = pl.BlockSpec(memory_space=pltpu.MemorySpace.VMEM)
    out_h, out_res = pl.pallas_call(
        partial(decoder_layer_kernel, has_residual=has_residual),
        out_shape=(jax.ShapeDtypeStruct((tp, H), jnp.bfloat16),
                   jax.ShapeDtypeStruct((tp, H), jnp.float32)),
        in_specs=[vmem] * len(inputs),
        out_specs=(vmem, vmem),
        compiler_params=pltpu.CompilerParams(vmem_limit_bytes=32 * 1024 * 1024),
        cost_estimate=pl.CostEstimate(flops=int(flops),
                                      transcendentals=int(transc),
                                      bytes_accessed=int(in_bytes + out_bytes)),
    )(*inputs)
    return out_h[:t], out_res[:t]


# ---------------- pure-JAX reference (module semantics, same bf16 discipline) --
def reference(hidden, residual, positions, raw):
    f32 = jnp.float32
    cos, sin = compute_xdrope_cos_sin(positions)

    def bdot(a, b):
        return jnp.dot(a.astype(jnp.bfloat16), b.astype(jnp.bfloat16),
                       preferred_element_type=f32)

    def rmsnorm(x, w):
        var = jnp.mean(x * x, axis=-1, keepdims=True)
        return x * lax.rsqrt(var + EPS) * w

    def rope(x):
        half = D // 2
        rot = jnp.concatenate([-x[:, half:], x[:, :half]], axis=-1)
        return x * cos + rot * sin

    h = hidden.astype(f32) if residual is None else hidden + residual
    normed = rmsnorm(h, raw["ln_in_w"])
    qkv = bdot(normed, raw["w_qkv"])
    t = hidden.shape[0]
    causal = jnp.tril(jnp.ones((t, t), bool))
    stride = (GROUPS + 2) * D
    heads = []
    for g in range(NKV):
        base = g * stride
        k_h = rmsnorm(rope(qkv[:, base + GROUPS * D: base + (GROUPS + 1) * D]),
                      raw["k_norm_w"])
        v_h = qkv[:, base + (GROUPS + 1) * D: base + (GROUPS + 2) * D]
        for j in range(GROUPS):
            q_h = rmsnorm(rope(qkv[:, base + j * D: base + (j + 1) * D]),
                          raw["q_norm_w"])
            s = bdot(q_h, k_h.T) * SCALING
            s = jnp.where(causal, s, -1e30)
            pr = jax.nn.softmax(s, axis=-1)
            heads.append(bdot(pr, v_h))
    attn = bdot(jnp.concatenate(heads, axis=-1), raw["w_o"])
    h2 = attn + h
    normed2 = rmsnorm(h2, raw["ln_post_w"])
    gu = bdot(normed2, raw["w_gate_up"])
    act = jax.nn.silu(gu[:, :I]) * gu[:, I:]
    return bdot(act, raw["w_down"]), h2


# ---------------- main ---------------------------------------------------------
if __name__ == "__main__":
    key = jax.random.PRNGKey(0)
    ks = jax.random.split(key, 10)

    hidden = jax.random.normal(ks[0], (T, H), jnp.float32)
    positions = jnp.stack([jnp.arange(T),
                           jnp.arange(T) % 5,
                           jnp.arange(T) % 3,
                           jnp.arange(T) % 2]).astype(jnp.int32)   # [4, T]

    raw = {
        "w_qkv":     jax.random.normal(ks[1], (H, QKV_OUT)) * (H ** -0.5),
        "w_o":       jax.random.normal(ks[2], (NH * D, H)) * ((NH * D) ** -0.5),
        "q_norm_w":  1.0 + 0.1 * jax.random.normal(ks[3], (1, D)),
        "k_norm_w":  1.0 + 0.1 * jax.random.normal(ks[4], (1, D)),
        "w_gate_up": jax.random.normal(ks[5], (H, 2 * I)) * (H ** -0.5),
        "w_down":    jax.random.normal(ks[6], (I, H)) * (I ** -0.5),
        "ln_in_w":   1.0 + 0.1 * jax.random.normal(ks[7], (1, H)),
        "ln_post_w": 1.0 + 0.1 * jax.random.normal(ks[8], (1, H)),
    }
    raw = {k: v.astype(jnp.float32) for k, v in raw.items()}
    params = prepare_params(raw)

    # layer-0 path: residual is None (specialized kernel, no zeros-residual add)
    out_h, out_res = hunyuan_decoder_layer(hidden, None, positions, params)
    jax.block_until_ready((out_h, out_res))
    ref_h, ref_res = reference(hidden, None, positions, raw)
    assert jnp.allclose(out_h, ref_h, rtol=2e-2, atol=2e-2), "hidden mismatch (no residual)"
    assert jnp.allclose(out_res, ref_res, rtol=2e-2, atol=2e-2), "residual mismatch (no residual)"

    # later-layer path: residual present (fused-add RMSNorm)
    residual = jax.random.normal(ks[9], (T, H), jnp.float32)
    out_h2, out_res2 = hunyuan_decoder_layer(out_h, residual, positions, params)
    jax.block_until_ready((out_h2, out_res2))
    ref_h2, ref_res2 = reference(out_h, residual, positions, raw)
    assert jnp.allclose(out_h2, ref_h2, rtol=2e-2, atol=2e-2), "hidden mismatch (residual)"
    assert jnp.allclose(out_res2, ref_res2, rtol=2e-2, atol=2e-2), "residual mismatch (residual)"

    print("KERNEL_OK")
</pallas_src>

<mosaic_0001>
module attributes {stable_mosaic.version = 11 : i64} {
  func.func @decoder_layer_kernel(%arg0: memref<8x128xf32, #tpu.memory_space<vmem>>, %arg1: memref<8x32xf32, #tpu.memory_space<vmem>>, %arg2: memref<8x32xf32, #tpu.memory_space<vmem>>, %arg3: memref<128x256xbf16, #tpu.memory_space<vmem>>, %arg4: memref<1x32xf32, #tpu.memory_space<vmem>>, %arg5: memref<1x32xf32, #tpu.memory_space<vmem>>, %arg6: memref<128x128xbf16, #tpu.memory_space<vmem>>, %arg7: memref<128x512xbf16, #tpu.memory_space<vmem>>, %arg8: memref<256x128xbf16, #tpu.memory_space<vmem>>, %arg9: memref<1x128xf32, #tpu.memory_space<vmem>>, %arg10: memref<1x128xf32, #tpu.memory_space<vmem>>, %arg11: memref<8x128xbf16, #tpu.memory_space<vmem>>, %arg12: memref<8x128xf32, #tpu.memory_space<vmem>>) attributes {dimension_semantics = [], scalar_prefetch = 0 : i64, scratch_operands = 0 : i64, tpu.core_type = #tpu.core_type<tc>} {
    %c0 = arith.constant 0 : index
    %c0_0 = arith.constant 0 : index
    %0 = vector.load %arg0[%c0, %c0_0] : memref<8x128xf32, #tpu.memory_space<vmem>>, vector<8x128xf32>
    %c0_1 = arith.constant 0 : index
    %c0_2 = arith.constant 0 : index
    %1 = vector.load %arg9[%c0_1, %c0_2] : memref<1x128xf32, #tpu.memory_space<vmem>>, vector<1x128xf32>
    %2 = arith.mulf %0, %0 : vector<8x128xf32>
    %cst = arith.constant dense<0.000000e+00> : vector<8xf32>
    %3 = vector.multi_reduction <add>, %2, %cst [1] : vector<8x128xf32> to vector<8xf32>
    %4 = vector.shape_cast %3 : vector<8xf32> to vector<8x1xf32>
    %cst_3 = arith.constant 1.280000e+02 : f32
    %5 = vector.broadcast %cst_3 : f32 to vector<8x1xf32>
    %6 = arith.divf %4, %5 : vector<8x1xf32>
    %cst_4 = arith.constant 9.99999997E-7 : f32
    %7 = vector.broadcast %cst_4 : f32 to vector<8x1xf32>
    %8 = arith.addf %6, %7 : vector<8x1xf32>
    %9 = math.rsqrt %8 : vector<8x1xf32>
    %10 = vector.broadcast %9 : vector<8x1xf32> to vector<8x128xf32>
    %11 = arith.mulf %0, %10 : vector<8x128xf32>
    %12 = vector.broadcast %1 : vector<1x128xf32> to vector<8x128xf32>
    %13 = arith.mulf %11, %12 : vector<8x128xf32>
    %14 = arith.truncf %13 : vector<8x128xf32> to vector<8x128xbf16>
    %c0_5 = arith.constant 0 : index
    %c0_6 = arith.constant 0 : index
    %15 = vector.load %arg3[%c0_5, %c0_6] : memref<128x256xbf16, #tpu.memory_space<vmem>>, vector<128x256xbf16>
    %cst_7 = arith.constant dense<0.000000e+00> : vector<8x256xf32>
    %16 = tpu.matmul %14, %15, %cst_7 {dimension_numbers = #tpu.dot_dimension_numbers<[1], [0], [0], [1], [0, 0, 1, 1], [], []>} : vector<8x128xbf16>, vector<128x256xbf16>, vector<8x256xf32> -> vector<8x256xf32>
    %c0_8 = arith.constant 0 : index
    %c0_9 = arith.constant 0 : index
    %17 = vector.load %arg1[%c0_8, %c0_9] : memref<8x32xf32, #tpu.memory_space<vmem>>, vector<8x32xf32>
    %c0_10 = arith.constant 0 : index
    %c0_11 = arith.constant 0 : index
    %18 = vector.load %arg2[%c0_10, %c0_11] : memref<8x32xf32, #tpu.memory_space<vmem>>, vector<8x32xf32>
    %cst_12 = arith.constant 1.000000e+00 : f32
    %19 = vector.broadcast %cst_12 : f32 to vector<8x64xf32>
    %20 = tpu.concatenate %17, %17, %17, %17, %17, %17, %19 in 1 : vector<8x32xf32>, vector<8x32xf32>, vector<8x32xf32>, vector<8x32xf32>, vector<8x32xf32>, vector<8x32xf32>, vector<8x64xf32> -> vector<8x256xf32>
    %cst_13 = arith.constant 0.000000e+00 : f32
    %21 = vector.broadcast %cst_13 : f32 to vector<8x64xf32>
    %22 = tpu.concatenate %18, %18, %18, %18, %18, %18, %21 in 1 : vector<8x32xf32>, vector<8x32xf32>, vector<8x32xf32>, vector<8x32xf32>, vector<8x32xf32>, vector<8x32xf32>, vector<8x64xf32> -> vector<8x256xf32>
    %23 = tpu.iota {dimensions = array<i32: 1>} : vector<8x256xi32>
    %c32_i32 = arith.constant 32 : i32
    %c0_i32 = arith.constant 0 : i32
    %24 = arith.cmpi eq, %c32_i32, %c0_i32 : i32
    %c1_i32 = arith.constant 1 : i32
    %25 = arith.select %24, %c1_i32, %c32_i32 : i32
    %26 = vector.broadcast %25 : i32 to vector<8x256xi32>
    %27 = arith.remsi %23, %26 : vector<8x256xi32>
    %c0_i32_14 = arith.constant 0 : i32
    %28 = vector.broadcast %c0_i32_14 : i32 to vector<8x256xi32>
    %29 = arith.cmpi ne, %27, %28 : vector<8x256xi32>
    %c0_i32_15 = arith.constant 0 : i32
    %30 = vector.broadcast %c0_i32_15 : i32 to vector<8x256xi32>
    %31 = arith.cmpi slt, %27, %30 : vector<8x256xi32>
    %c0_i32_16 = arith.constant 0 : i32
    %32 = arith.cmpi slt, %25, %c0_i32_16 : i32
    %33 = vector.broadcast %32 : i1 to vector<8x256xi1>
    %34 = vector.broadcast %33 : vector<8x256xi1> to vector<8x256xi1>
    %35 = arith.xori %31, %34 : vector<8x256xi1>
    %36 = arith.andi %35, %29 : vector<8x256xi1>
    %37 = vector.broadcast %25 : i32 to vector<8x256xi32>
    %38 = arith.addi %27, %37 : vector<8x256xi32>
    %39 = arith.select %36, %38, %27 : vector<8x256xi1>, vector<8x256xi32>
    %c16_i32 = arith.constant 16 : i32
    %40 = vector.broadcast %c16_i32 : i32 to vector<8x256xi32>
    %41 = arith.cmpi slt, %39, %40 : vector<8x256xi32>
    %c16_i32_17 = arith.constant 16 : i32
    %42 = tpu.dynamic_rotate %16 by %c16_i32_17 dim 1 : vector<8x256xf32>, i32 -> vector<8x256xf32>
    %c240_i32 = arith.constant 240 : i32
    %43 = tpu.dynamic_rotate %16 by %c240_i32 dim 1 : vector<8x256xf32>, i32 -> vector<8x256xf32>
    %cst_18 = arith.constant 0.000000e+00 : f32
    %44 = vector.broadcast %cst_18 : f32 to vector<8x256xf32>
    %45 = arith.subf %44, %43 : vector<8x256xf32>
    %46 = arith.select %41, %45, %42 : vector<8x256xi1>, vector<8x256xf32>
    %47 = arith.mulf %16, %20 : vector<8x256xf32>
    %48 = arith.mulf %46, %22 : vector<8x256xf32>
    %49 = arith.addf %47, %48 : vector<8x256xf32>
    %50 = tpu.iota {dimensions = array<i32: 0>} : vector<8x8xi32>
    %51 = tpu.iota {dimensions = array<i32: 1>} : vector<8x8xi32>
    %52 = arith.cmpi sge, %50, %51 : vector<8x8xi32>
    %c0_19 = arith.constant 0 : index
    %c0_20 = arith.constant 0 : index
    %53 = vector.load %arg4[%c0_19, %c0_20] : memref<1x32xf32, #tpu.memory_space<vmem>>, vector<1x32xf32>
    %c0_21 = arith.constant 0 : index
    %c0_22 = arith.constant 0 : index
    %54 = vector.load %arg5[%c0_21, %c0_22] : memref<1x32xf32, #tpu.memory_space<vmem>>, vector<1x32xf32>
    %55 = vector.extract_strided_slice %49 {offsets = [0, 128], sizes = [8, 32], strides = [1, 1]} : vector<8x256xf32> to vector<8x32xf32>
    %56 = arith.mulf %55, %55 : vector<8x32xf32>
    %cst_23 = arith.constant dense<0.000000e+00> : vector<8xf32>
    %57 = vector.multi_reduction <add>, %56, %cst_23 [1] : vector<8x32xf32> to vector<8xf32>
    %58 = vector.shape_cast %57 : vector<8xf32> to vector<8x1xf32>
    %cst_24 = arith.constant 3.200000e+01 : f32
    %59 = vector.broadcast %cst_24 : f32 to vector<8x1xf32>
    %60 = arith.divf %58, %59 : vector<8x1xf32>
    %cst_25 = arith.constant 9.99999997E-7 : f32
    %61 = vector.broadcast %cst_25 : f32 to vector<8x1xf32>
    %62 = arith.addf %60, %61 : vector<8x1xf32>
    %63 = math.rsqrt %62 : vector<8x1xf32>
    %64 = vector.broadcast %63 : vector<8x1xf32> to vector<8x32xf32>
    %65 = arith.mulf %55, %64 : vector<8x32xf32>
    %66 = vector.broadcast %54 : vector<1x32xf32> to vector<8x32xf32>
    %67 = arith.mulf %65, %66 : vector<8x32xf32>
    %68 = arith.truncf %67 : vector<8x32xf32> to vector<8x32xbf16>
    %69 = vector.extract_strided_slice %49 {offsets = [0, 192], sizes = [8, 32], strides = [1, 1]} : vector<8x256xf32> to vector<8x32xf32>
    %70 = arith.truncf %69 : vector<8x32xf32> to vector<8x32xbf16>
    %71 = vector.extract_strided_slice %49 {offsets = [0, 0], sizes = [8, 32], strides = [1, 1]} : vector<8x256xf32> to vector<8x32xf32>
    %72 = arith.mulf %71, %71 : vector<8x32xf32>
    %cst_26 = arith.constant dense<0.000000e+00> : vector<8xf32>
    %73 = vector.multi_reduction <add>, %72, %cst_26 [1] : vector<8x32xf32> to vector<8xf32>
    %74 = vector.shape_cast %73 : vector<8xf32> to vector<8x1xf32>
    %cst_27 = arith.constant 3.200000e+01 : f32
    %75 = vector.broadcast %cst_27 : f32 to vector<8x1xf32>
    %76 = arith.divf %74, %75 : vector<8x1xf32>
    %cst_28 = arith.constant 9.99999997E-7 : f32
    %77 = vector.broadcast %cst_28 : f32 to vector<8x1xf32>
    %78 = arith.addf %76, %77 : vector<8x1xf32>
    %79 = math.rsqrt %78 : vector<8x1xf32>
    %80 = vector.broadcast %79 : vector<8x1xf32> to vector<8x32xf32>
    %81 = arith.mulf %71, %80 : vector<8x32xf32>
    %82 = vector.broadcast %53 : vector<1x32xf32> to vector<8x32xf32>
    %83 = arith.mulf %81, %82 : vector<8x32xf32>
    %84 = arith.truncf %83 : vector<8x32xf32> to vector<8x32xbf16>
    %cst_29 = arith.constant dense<0.000000e+00> : vector<8x8xf32>
    %85 = tpu.matmul %84, %68, %cst_29 {dimension_numbers = #tpu.dot_dimension_numbers<[1], [1], [0], [0], [0, 0, 1, 0], [], []>} : vector<8x32xbf16>, vector<8x32xbf16>, vector<8x8xf32> -> vector<8x8xf32>
    %cst_30 = arith.constant 0.176776692 : f32
    %86 = vector.broadcast %cst_30 : f32 to vector<8x8xf32>
    %87 = arith.mulf %85, %86 : vector<8x8xf32>
    %cst_31 = arith.constant -1.000000e+30 : f32
    %88 = vector.broadcast %cst_31 : f32 to vector<8x8xf32>
    %89 = arith.select %52, %87, %88 : vector<8x8xi1>, vector<8x8xf32>
    %cst_32 = arith.constant dense<0xFF800000> : vector<8xf32>
    %90 = vector.multi_reduction <maximumf>, %89, %cst_32 [1] : vector<8x8xf32> to vector<8xf32>
    %91 = vector.shape_cast %90 : vector<8xf32> to vector<8x1xf32>
    %92 = vector.broadcast %91 : vector<8x1xf32> to vector<8x8xf32>
    %93 = arith.subf %89, %92 : vector<8x8xf32>
    %94 = math.exp %93 : vector<8x8xf32>
    %cst_33 = arith.constant dense<0.000000e+00> : vector<8xf32>
    %95 = vector.multi_reduction <add>, %94, %cst_33 [1] : vector<8x8xf32> to vector<8xf32>
    %96 = vector.shape_cast %95 : vector<8xf32> to vector<8x1xf32>
    %97 = arith.truncf %94 : vector<8x8xf32> to vector<8x8xbf16>
    %cst_34 = arith.constant dense<0.000000e+00> : vector<8x32xf32>
    %98 = tpu.matmul %97, %70, %cst_34 {dimension_numbers = #tpu.dot_dimension_numbers<[1], [0], [0], [1], [0, 0, 1, 1], [], []>} : vector<8x8xbf16>, vector<8x32xbf16>, vector<8x32xf32> -> vector<8x32xf32>
    %99 = vector.broadcast %96 : vector<8x1xf32> to vector<8x32xf32>
    %100 = arith.divf %98, %99 : vector<8x32xf32>
    %101 = vector.extract_strided_slice %49 {offsets = [0, 32], sizes = [8, 32], strides = [1, 1]} : vector<8x256xf32> to vector<8x32xf32>
    %102 = arith.mulf %101, %101 : vector<8x32xf32>
    %cst_35 = arith.constant dense<0.000000e+00> : vector<8xf32>
    %103 = vector.multi_reduction <add>, %102, %cst_35 [1] : vector<8x32xf32> to vector<8xf32>
    %104 = vector.shape_cast %103 : vector<8xf32> to vector<8x1xf32>
    %cst_36 = arith.constant 3.200000e+01 : f32
    %105 = vector.broadcast %cst_36 : f32 to vector<8x1xf32>
    %106 = arith.divf %104, %105 : vector<8x1xf32>
    %cst_37 = arith.constant 9.99999997E-7 : f32
    %107 = vector.broadcast %cst_37 : f32 to vector<8x1xf32>
    %108 = arith.addf %106, %107 : vector<8x1xf32>
    %109 = math.rsqrt %108 : vector<8x1xf32>
    %110 = vector.broadcast %109 : vector<8x1xf32> to vector<8x32xf32>
    %111 = arith.mulf %101, %110 : vector<8x32xf32>
    %112 = vector.broadcast %53 : vector<1x32xf32> to vector<8x32xf32>
    %113 = arith.mulf %111, %112 : vector<8x32xf32>
    %114 = arith.truncf %113 : vector<8x32xf32> to vector<8x32xbf16>
    %cst_38 = arith.constant dense<0.000000e+00> : vector<8x8xf32>
    %115 = tpu.matmul %114, %68, %cst_38 {dimension_numbers = #tpu.dot_dimension_numbers<[1], [1], [0], [0], [0, 0, 1, 0], [], []>} : vector<8x32xbf16>, vector<8x32xbf16>, vector<8x8xf32> -> vector<8x8xf32>
    %cst_39 = arith.constant 0.176776692 : f32
    %116 = vector.broadcast %cst_39 : f32 to vector<8x8xf32>
    %117 = arith.mulf %115, %116 : vector<8x8xf32>
    %cst_40 = arith.constant -1.000000e+30 : f32
    %118 = vector.broadcast %cst_40 : f32 to vector<8x8xf32>
    %119 = arith.select %52, %117, %118 : vector<8x8xi1>, vector<8x8xf32>
    %cst_41 = arith.constant dense<0xFF800000> : vector<8xf32>
    %120 = vector.multi_reduction <maximumf>, %119, %cst_41 [1] : vector<8x8xf32> to vector<8xf32>
    %121 = vector.shape_cast %120 : vector<8xf32> to vector<8x1xf32>
    %122 = vector.broadcast %121 : vector<8x1xf32> to vector<8x8xf32>
    %123 = arith.subf %119, %122 : vector<8x8xf32>
    %124 = math.exp %123 : vector<8x8xf32>
    %cst_42 = arith.constant dense<0.000000e+00> : vector<8xf32>
    %125 = vector.multi_reduction <add>, %124, %cst_42 [1] : vector<8x8xf32> to vector<8xf32>
    %126 = vector.shape_cast %125 : vector<8xf32> to vector<8x1xf32>
    %127 = arith.truncf %124 : vector<8x8xf32> to vector<8x8xbf16>
    %cst_43 = arith.constant dense<0.000000e+00> : vector<8x32xf32>
    %128 = tpu.matmul %127, %70, %cst_43 {dimension_numbers = #tpu.dot_dimension_numbers<[1], [0], [0], [1], [0, 0, 1, 1], [], []>} : vector<8x8xbf16>, vector<8x32xbf16>, vector<8x32xf32> -> vector<8x32xf32>
    %129 = vector.broadcast %126 : vector<8x1xf32> to vector<8x32xf32>
    %130 = arith.divf %128, %129 : vector<8x32xf32>
    %131 = vector.extract_strided_slice %49 {offsets = [0, 160], sizes = [8, 32], strides = [1, 1]} : vector<8x256xf32> to vector<8x32xf32>
    %132 = arith.mulf %131, %131 : vector<8x32xf32>
    %cst_44 = arith.constant dense<0.000000e+00> : vector<8xf32>
    %133 = vector.multi_reduction <add>, %132, %cst_44 [1] : vector<8x32xf32> to vector<8xf32>
    %134 = vector.shape_cast %133 : vector<8xf32> to vector<8x1xf32>
    %cst_45 = arith.constant 3.200000e+01 : f32
    %135 = vector.broadcast %cst_45 : f32 to vector<8x1xf32>
    %136 = arith.divf %134, %135 : vector<8x1xf32>
    %cst_46 = arith.constant 9.99999997E-7 : f32
    %137 = vector.broadcast %cst_46 : f32 to vector<8x1xf32>
    %138 = arith.addf %136, %137 : vector<8x1xf32>
    %139 = math.rsqrt %138 : vector<8x1xf32>
    %140 = vector.broadcast %139 : vector<8x1xf32> to vector<8x32xf32>
    %141 = arith.mulf %131, %140 : vector<8x32xf32>
    %142 = vector.broadcast %54 : vector<1x32xf32> to vector<8x32xf32>
    %143 = arith.mulf %141, %142 : vector<8x32xf32>
    %144 = arith.truncf %143 : vector<8x32xf32> to vector<8x32xbf16>
    %145 = vector.extract_strided_slice %49 {offsets = [0, 224], sizes = [8, 32], strides = [1, 1]} : vector<8x256xf32> to vector<8x32xf32>
    %146 = arith.truncf %145 : vector<8x32xf32> to vector<8x32xbf16>
    %147 = vector.extract_strided_slice %49 {offsets = [0, 64], sizes = [8, 32], strides = [1, 1]} : vector<8x256xf32> to vector<8x32xf32>
    %148 = arith.mulf %147, %147 : vector<8x32xf32>
    %cst_47 = arith.constant dense<0.000000e+00> : vector<8xf32>
    %149 = vector.multi_reduction <add>, %148, %cst_47 [1] : vector<8x32xf32> to vector<8xf32>
    %150 = vector.shape_cast %149 : vector<8xf32> to vector<8x1xf32>
    %cst_48 = arith.constant 3.200000e+01 : f32
    %151 = vector.broadcast %cst_48 : f32 to vector<8x1xf32>
    %152 = arith.divf %150, %151 : vector<8x1xf32>
    %cst_49 = arith.constant 9.99999997E-7 : f32
    %153 = vector.broadcast %cst_49 : f32 to vector<8x1xf32>
    %154 = arith.addf %152, %153 : vector<8x1xf32>
    %155 = math.rsqrt %154 : vector<8x1xf32>
    %156 = vector.broadcast %155 : vector<8x1xf32> to vector<8x32xf32>
    %157 = arith.mulf %147, %156 : vector<8x32xf32>
    %158 = vector.broadcast %53 : vector<1x32xf32> to vector<8x32xf32>
    %159 = arith.mulf %157, %158 : vector<8x32xf32>
    %160 = arith.truncf %159 : vector<8x32xf32> to vector<8x32xbf16>
    %cst_50 = arith.constant dense<0.000000e+00> : vector<8x8xf32>
    %161 = tpu.matmul %160, %144, %cst_50 {dimension_numbers = #tpu.dot_dimension_numbers<[1], [1], [0], [0], [0, 0, 1, 0], [], []>} : vector<8x32xbf16>, vector<8x32xbf16>, vector<8x8xf32> -> vector<8x8xf32>
    %cst_51 = arith.constant 0.176776692 : f32
    %162 = vector.broadcast %cst_51 : f32 to vector<8x8xf32>
    %163 = arith.mulf %161, %162 : vector<8x8xf32>
    %cst_52 = arith.constant -1.000000e+30 : f32
    %164 = vector.broadcast %cst_52 : f32 to vector<8x8xf32>
    %165 = arith.select %52, %163, %164 : vector<8x8xi1>, vector<8x8xf32>
    %cst_53 = arith.constant dense<0xFF800000> : vector<8xf32>
    %166 = vector.multi_reduction <maximumf>, %165, %cst_53 [1] : vector<8x8xf32> to vector<8xf32>
    %167 = vector.shape_cast %166 : vector<8xf32> to vector<8x1xf32>
    %168 = vector.broadcast %167 : vector<8x1xf32> to vector<8x8xf32>
    %169 = arith.subf %165, %168 : vector<8x8xf32>
    %170 = math.exp %169 : vector<8x8xf32>
    %cst_54 = arith.constant dense<0.000000e+00> : vector<8xf32>
    %171 = vector.multi_reduction <add>, %170, %cst_54 [1] : vector<8x8xf32> to vector<8xf32>
    %172 = vector.shape_cast %171 : vector<8xf32> to vector<8x1xf32>
    %173 = arith.truncf %170 : vector<8x8xf32> to vector<8x8xbf16>
    %cst_55 = arith.constant dense<0.000000e+00> : vector<8x32xf32>
    %174 = tpu.matmul %173, %146, %cst_55 {dimension_numbers = #tpu.dot_dimension_numbers<[1], [0], [0], [1], [0, 0, 1, 1], [], []>} : vector<8x8xbf16>, vector<8x32xbf16>, vector<8x32xf32> -> vector<8x32xf32>
    %175 = vector.broadcast %172 : vector<8x1xf32> to vector<8x32xf32>
    %176 = arith.divf %174, %175 : vector<8x32xf32>
    %177 = vector.extract_strided_slice %49 {offsets = [0, 96], sizes = [8, 32], strides = [1, 1]} : vector<8x256xf32> to vector<8x32xf32>
    %178 = arith.mulf %177, %177 : vector<8x32xf32>
    %cst_56 = arith.constant dense<0.000000e+00> : vector<8xf32>
    %179 = vector.multi_reduction <add>, %178, %cst_56 [1] : vector<8x32xf32> to vector<8xf32>
    %180 = vector.shape_cast %179 : vector<8xf32> to vector<8x1xf32>
    %cst_57 = arith.constant 3.200000e+01 : f32
    %181 = vector.broadcast %cst_57 : f32 to vector<8x1xf32>
    %182 = arith.divf %180, %181 : vector<8x1xf32>
    %cst_58 = arith.constant 9.99999997E-7 : f32
    %183 = vector.broadcast %cst_58 : f32 to vector<8x1xf32>
    %184 = arith.addf %182, %183 : vector<8x1xf32>
    %185 = math.rsqrt %184 : vector<8x1xf32>
    %186 = vector.broadcast %185 : vector<8x1xf32> to vector<8x32xf32>
    %187 = arith.mulf %177, %186 : vector<8x32xf32>
    %188 = vector.broadcast %53 : vector<1x32xf32> to vector<8x32xf32>
    %189 = arith.mulf %187, %188 : vector<8x32xf32>
    %190 = arith.truncf %189 : vector<8x32xf32> to vector<8x32xbf16>
    %cst_59 = arith.constant dense<0.000000e+00> : vector<8x8xf32>
    %191 = tpu.matmul %190, %144, %cst_59 {dimension_numbers = #tpu.dot_dimension_numbers<[1], [1], [0], [0], [0, 0, 1, 0], [], []>} : vector<8x32xbf16>, vector<8x32xbf16>, vector<8x8xf32> -> vector<8x8xf32>
    %cst_60 = arith.constant 0.176776692 : f32
    %192 = vector.broadcast %cst_60 : f32 to vector<8x8xf32>
    %193 = arith.mulf %191, %192 : vector<8x8xf32>
    %cst_61 = arith.constant -1.000000e+30 : f32
    %194 = vector.broadcast %cst_61 : f32 to vector<8x8xf32>
    %195 = arith.select %52, %193, %194 : vector<8x8xi1>, vector<8x8xf32>
    %cst_62 = arith.constant dense<0xFF800000> : vector<8xf32>
    %196 = vector.multi_reduction <maximumf>, %195, %cst_62 [1] : vector<8x8xf32> to vector<8xf32>
    %197 = vector.shape_cast %196 : vector<8xf32> to vector<8x1xf32>
    %198 = vector.broadcast %197 : vector<8x1xf32> to vector<8x8xf32>
    %199 = arith.subf %195, %198 : vector<8x8xf32>
    %200 = math.exp %199 : vector<8x8xf32>
    %cst_63 = arith.constant dense<0.000000e+00> : vector<8xf32>
    %201 = vector.multi_reduction <add>, %200, %cst_63 [1] : vector<8x8xf32> to vector<8xf32>
    %202 = vector.shape_cast %201 : vector<8xf32> to vector<8x1xf32>
    %203 = arith.truncf %200 : vector<8x8xf32> to vector<8x8xbf16>
    %cst_64 = arith.constant dense<0.000000e+00> : vector<8x32xf32>
    %204 = tpu.matmul %203, %146, %cst_64 {dimension_numbers = #tpu.dot_dimension_numbers<[1], [0], [0], [1], [0, 0, 1, 1], [], []>} : vector<8x8xbf16>, vector<8x32xbf16>, vector<8x32xf32> -> vector<8x32xf32>
    %205 = vector.broadcast %202 : vector<8x1xf32> to vector<8x32xf32>
    %206 = arith.divf %204, %205 : vector<8x32xf32>
    %207 = tpu.concatenate %100, %130, %176, %206 in 1 : vector<8x32xf32>, vector<8x32xf32>, vector<8x32xf32>, vector<8x32xf32> -> vector<8x128xf32>
    %208 = arith.truncf %207 : vector<8x128xf32> to vector<8x128xbf16>
    %c0_65 = arith.constant 0 : index
    %c0_66 = arith.constant 0 : index
    %209 = vector.load %arg6[%c0_65, %c0_66] : memref<128x128xbf16, #tpu.memory_space<vmem>>, vector<128x128xbf16>
    %cst_67 = arith.constant dense<0.000000e+00> : vector<8x128xf32>
    %210 = tpu.matmul %208, %209, %cst_67 {dimension_numbers = #tpu.dot_dimension_numbers<[1], [0], [0], [1], [0, 0, 1, 1], [], []>} : vector<8x128xbf16>, vector<128x128xbf16>, vector<8x128xf32> -> vector<8x128xf32>
    %211 = arith.addf %210, %0 : vector<8x128xf32>
    %c0_68 = arith.constant 0 : index
    %c0_69 = arith.constant 0 : index
    %212 = vector.load %arg12[%c0_68, %c0_69] : memref<8x128xf32, #tpu.memory_space<vmem>>, vector<8x128xf32>
    tpu.vector_store %arg12[%c0_68, %c0_69], %211 {strides = array<i32>} : memref<8x128xf32, #tpu.memory_space<vmem>>, vector<8x128xf32>,
    %c0_70 = arith.constant 0 : index
    %c0_71 = arith.constant 0 : index
    %213 = vector.load %arg10[%c0_70, %c0_71] : memref<1x128xf32, #tpu.memory_space<vmem>>, vector<1x128xf32>
    %214 = arith.mulf %211, %211 : vector<8x128xf32>
    %cst_72 = arith.constant dense<0.000000e+00> : vector<8xf32>
    %215 = vector.multi_reduction <add>, %214, %cst_72 [1] : vector<8x128xf32> to vector<8xf32>
    %216 = vector.shape_cast %215 : vector<8xf32> to vector<8x1xf32>
    %cst_73 = arith.constant 1.280000e+02 : f32
    %217 = vector.broadcast %cst_73 : f32 to vector<8x1xf32>
    %218 = arith.divf %216, %217 : vector<8x1xf32>
    %cst_74 = arith.constant 9.99999997E-7 : f32
    %219 = vector.broadcast %cst_74 : f32 to vector<8x1xf32>
    %220 = arith.addf %218, %219 : vector<8x1xf32>
    %221 = math.rsqrt %220 : vector<8x1xf32>
    %222 = vector.broadcast %221 : vector<8x1xf32> to vector<8x128xf32>
    %223 = arith.mulf %211, %222 : vector<8x128xf32>
    %224 = vector.broadcast %213 : vector<1x128xf32> to vector<8x128xf32>
    %225 = arith.mulf %223, %224 : vector<8x128xf32>
    %226 = arith.truncf %225 : vector<8x128xf32> to vector<8x128xbf16>
    %c0_75 = arith.constant 0 : index
    %c0_76 = arith.constant 0 : index
    %227 = vector.load %arg7[%c0_75, %c0_76] : memref<128x512xbf16, #tpu.memory_space<vmem>>, vector<128x512xbf16>
    %cst_77 = arith.constant dense<0.000000e+00> : vector<8x512xf32>
    %228 = tpu.matmul %226, %227, %cst_77 {dimension_numbers = #tpu.dot_dimension_numbers<[1], [0], [0], [1], [0, 0, 1, 1], [], []>} : vector<8x128xbf16>, vector<128x512xbf16>, vector<8x512xf32> -> vector<8x512xf32>
    %229 = vector.extract_strided_slice %228 {offsets = [0, 0], sizes = [8, 256], strides = [1, 1]} : vector<8x512xf32> to vector<8x256xf32>
    %230 = vector.extract_strided_slice %228 {offsets = [0, 256], sizes = [8, 256], strides = [1, 1]} : vector<8x512xf32> to vector<8x256xf32>
    %231 = arith.negf %229 : vector<8x256xf32>
    %232 = math.exp %231 : vector<8x256xf32>
    %cst_78 = arith.constant 1.000000e+00 : f32
    %233 = vector.broadcast %cst_78 : f32 to vector<8x256xf32>
    %234 = arith.addf %233, %232 : vector<8x256xf32>
    %235 = arith.divf %233, %234 : vector<8x256xf32>
    %236 = arith.mulf %229, %235 : vector<8x256xf32>
    %237 = arith.mulf %236, %230 : vector<8x256xf32>
    %238 = arith.truncf %237 : vector<8x256xf32> to vector<8x256xbf16>
    %c0_79 = arith.constant 0 : index
    %c0_80 = arith.constant 0 : index
    %239 = vector.load %arg8[%c0_79, %c0_80] : memref<256x128xbf16, #tpu.memory_space<vmem>>, vector<256x128xbf16>
    %cst_81 = arith.constant dense<0.000000e+00> : vector<8x128xf32>
    %240 = tpu.matmul %238, %239, %cst_81 {dimension_numbers = #tpu.dot_dimension_numbers<[1], [0], [0], [1], [0, 0, 1, 1], [], []>} : vector<8x256xbf16>, vector<256x128xbf16>, vector<8x128xf32> -> vector<8x128xf32>
    %241 = arith.truncf %240 : vector<8x128xf32> to vector<8x128xbf16>
    %c0_82 = arith.constant 0 : index
    %c0_83 = arith.constant 0 : index
    %242 = vector.load %arg11[%c0_82, %c0_83] : memref<8x128xbf16, #tpu.memory_space<vmem>>, vector<8x128xbf16>
    tpu.vector_store %arg11[%c0_82, %c0_83], %241 {strides = array<i32>} : memref<8x128xbf16, #tpu.memory_space<vmem>>, vector<8x128xbf16>,
    return
  }
}

</mosaic_0001>

<llo_original>
// kernel: tpu_custom_call.1
$region0: #{tpu_custom_call.1}
  #allocation0 [shape = 'u32[]', space=smem, size = 0x4, offset = 0x4, fixed_abs, tag = 'smem constant byte address 0x4 - core index']
  #allocation1 [shape = 'u32[144,128]{1,0:T(1,128)}', space=vmem, size = 0x12000, scoped, tag = 'internal scratch']
  %s0 = inlined_call_operand.hbm [shape: f32[8,128], index: 0, kind: input, shape index: {}]
  %s1 = inlined_call_operand.hbm [shape: f32[8,32], index: 1, kind: input, shape index: {}]
  %s2 = inlined_call_operand.hbm [shape: f32[8,32], index: 2, kind: input, shape index: {}]
  %s3 = inlined_call_operand.hbm [shape: bf16[128,256], index: 3, kind: input, shape index: {}]
  %s4 = inlined_call_operand.vmem [shape: f32[1,32], index: 4, kind: input, shape index: {}]
  %s5 = inlined_call_operand.vmem [shape: f32[1,32], index: 5, kind: input, shape index: {}]
  %s6 = inlined_call_operand.hbm [shape: bf16[128,128], index: 6, kind: input, shape index: {}]
  %s7 = inlined_call_operand.hbm [shape: bf16[128,512], index: 7, kind: input, shape index: {}]
  %s8 = inlined_call_operand.hbm [shape: bf16[256,128], index: 8, kind: input, shape index: {}]
  %s9 = inlined_call_operand.vmem [shape: f32[1,128], index: 9, kind: input, shape index: {}]
  %s10 = inlined_call_operand.vmem [shape: f32[1,128], index: 10, kind: input, shape index: {}]
  %s11 = inlined_call_operand.hbm [shape: bf16[8,128], index: 11, kind: output, shape index: {0}]
  %s12 = inlined_call_operand.hbm [shape: f32[8,128], index: 12, kind: output, shape index: {1}]
  %13 = xla_tuple %s11, %s12
  %s14 = sld [smem:[#allocation0]]
  $region90: #{tpu_custom_call.1} parent=0
    _
  %s16 = ssub.s32 1, %s14
  %s17 = scalar_select 0, %s16, %s14
  $region1: #{tpu_custom_call.1} parent=0
    #allocation2 [shape = 'u8[4096]{0}', space=vmem, size = 0x1000, scoped, tag = 'input window, operand 0, single buffered']
    #allocation3 [shape = 's32[1]{0}', space=sflag, size = 0x4, scoped, tag = 'scoped memory for tpu_custom_call.1']
    #allocation4 [shape = 's32[1]{0}', space=sflag, size = 0x4, scoped, tag = 'scoped memory for tpu_custom_call.1']
    #allocation5 [shape = 'u8[4096]{0}', space=vmem, size = 0x1000, scoped, tag = 'input window, operand 1, single buffered']
    #allocation6 [shape = 's32[1]{0}', space=sflag, size = 0x4, scoped, tag = 'scoped memory for tpu_custom_call.1']
    #allocation7 [shape = 'u8[4096]{0}', space=vmem, size = 0x1000, scoped, tag = 'input window, operand 2, single buffered']
    #allocation8 [shape = 'u8[65536]{0}', space=vmem, size = 0x10000, scoped, tag = 'input window, operand 3, single buffered']
    #allocation9 [shape = 's32[1]{0}', space=sflag, size = 0x4, scoped, tag = 'scoped memory for tpu_custom_call.1']
    #allocation10 [shape = 'u8[32768]{0}', space=vmem, size = 0x8000, scoped, tag = 'input window, operand 6, single buffered']
    #allocation11 [shape = 'u8[131072]{0}', space=vmem, size = 0x20000, scoped, tag = 'input window, operand 7, single buffered']
    #allocation12 [shape = 's32[1]{0}', space=sflag, size = 0x4, scoped, tag = 'scoped memory for tpu_custom_call.1']
    #allocation13 [shape = 'u8[65536]{0}', space=vmem, size = 0x10000, scoped, tag = 'input window, operand 8, single buffered']
    #allocation14 [shape = 'u8[2048]{0}', space=vmem, size = 0x800, scoped, tag = 'output window, operand 0, single buffered']
    #allocation15 [shape = 'u8[4096]{0}', space=vmem, size = 0x1000, scoped, tag = 'output window, operand 1, single buffered']
    #allocation16 [shape = 's32[1]{0}', space=sflag, size = 0x4, scoped, tag = 'scoped memory for tpu_custom_call.1']
    %18 = vsyncpa [#allocation3], 0
    %19 = vsyncpa [#allocation6], 0
    %20 = vsyncpa [#allocation9], 0
    %21 = vsyncpa [#allocation12], 0
    %22 = vsyncpa [#allocation4], 0
    %23 = vsyncpa [#allocation16], 0
    // Predicated region
    $region2: #{tpu_custom_call.1} parent=1 // pred_check
      _
    $region3: #{tpu_custom_call.1} parent=1 // pred_check_branch
      %25 = sbr.rel (0) target = $region5
    $region4: #{tpu_custom_call.1} parent=1 // pred_region
      %s27 = ssub.s32 128, 128
      %28 = vsyncadd [#allocation3], %s27
      %s30 = sshll.u32 [#allocation2], 4
      %s31 = int_to_ptr.vmem [resolvable:$true] %s30
      %33 = dma.hbm_to_vmem [thread:$0]  %s0, 128, %s31, [#allocation3]
    $region5: #{tpu_custom_call.1} parent=1 // pred_fallthru
      _
    // Predicated region
    $region6: #{tpu_custom_call.1} parent=1 // pred_check
      _
    $region7: #{tpu_custom_call.1} parent=1 // pred_check_branch
      %35 = sbr.rel (0) target = $region9
    $region8: #{tpu_custom_call.1} parent=1 // pred_region
      %s37 = ssub.s32 128, 128
      %38 = vsyncadd [#allocation6], %s37
      %s40 = sshll.u32 [#allocation5], 4
      %s41 = int_to_ptr.vmem [resolvable:$true] %s40
      %43 = dma.hbm_to_vmem [thread:$0]  %s1, 128, %s41, [#allocation6]
    $region9: #{tpu_custom_call.1} parent=1 // pred_fallthru
      _
    // Predicated region
    $region10: #{tpu_custom_call.1} parent=1 // pred_check
      _
    $region11: #{tpu_custom_call.1} parent=1 // pred_check_branch
      %45 = sbr.rel (0) target = $region13
    $region12: #{tpu_custom_call.1} parent=1 // pred_region
      %s47 = ssub.s32 128, 128
      %48 = vsyncadd [#allocation6], %s47
      %s50 = sshll.u32 [#allocation7], 4
      %s51 = int_to_ptr.vmem [resolvable:$true] %s50
      %53 = dma.hbm_to_vmem [thread:$0]  %s2, 128, %s51, [#allocation6]
    $region13: #{tpu_custom_call.1} parent=1 // pred_fallthru
      _
    // Predicated region
    $region14: #{tpu_custom_call.1} parent=1 // pred_check
      _
    $region15: #{tpu_custom_call.1} parent=1 // pred_check_branch
      %55 = sbr.rel (0) target = $region17
    $region16: #{tpu_custom_call.1} parent=1 // pred_region
      %s57 = ssub.s32 2048, 2048
      %58 = vsyncadd [#allocation9], %s57
      %s59 = sshll.u32 [#allocation8], 4
      %s60 = int_to_ptr.vmem [resolvable:$true] %s59
      %65 = dma.hbm_to_vmem [thread:$0]  %s3, 2048, %s60, [#allocation9], 128, 128, 8
    $region17: #{tpu_custom_call.1} parent=1 // pred_fallthru
      _
    // Predicated region
    $region18: #{tpu_custom_call.1} parent=1 // pred_check
      _
    $region19: #{tpu_custom_call.1} parent=1 // pred_check_branch
      %67 = sbr.rel (0) target = $region21
    $region20: #{tpu_custom_call.1} parent=1 // pred_region
      _
    $region21: #{tpu_custom_call.1} parent=1 // pred_fallthru
      _
    // Predicated region
    $region22: #{tpu_custom_call.1} parent=1 // pred_check
      _
    $region23: #{tpu_custom_call.1} parent=1 // pred_check_branch
      %69 = sbr.rel (0) target = $region25
    $region24: #{tpu_custom_call.1} parent=1 // pred_region
      _
    $region25: #{tpu_custom_call.1} parent=1 // pred_fallthru
      _
    // Predicated region
    $region26: #{tpu_custom_call.1} parent=1 // pred_check
      _
    $region27: #{tpu_custom_call.1} parent=1 // pred_check_branch
      %71 = sbr.rel (0) target = $region29
    $region28: #{tpu_custom_call.1} parent=1 // pred_region
      %s73 = ssub.s32 1024, 1024
      %74 = vsyncadd [#allocation9], %s73
      %s75 = sshll.u32 [#allocation10], 4
      %s76 = int_to_ptr.vmem [resolvable:$true] %s75
      %81 = dma.hbm_to_vmem [thread:$0]  %s6, 1024, %s76, [#allocation9], 64, 64, 4
    $region29: #{tpu_custom_call.1} parent=1 // pred_fallthru
      _
    // Predicated region
    $region30: #{tpu_custom_call.1} parent=1 // pred_check
      _
    $region31: #{tpu_custom_call.1} parent=1 // pred_check_branch
      %83 = sbr.rel (0) target = $region33
    $region32: #{tpu_custom_call.1} parent=1 // pred_region
      %s85 = ssub.s32 4096, 4096
      %86 = vsyncadd [#allocation12], %s85
      %s87 = sshll.u32 [#allocation11], 4
      %s88 = int_to_ptr.vmem [resolvable:$true] %s87
      %93 = dma.hbm_to_vmem [thread:$0]  %s7, 4096, %s88, [#allocation12], 256, 256, 16
    $region33: #{tpu_custom_call.1} parent=1 // pred_fallthru
      _
    // Predicated region
    $region34: #{tpu_custom_call.1} parent=1 // pred_check
      _
    $region35: #{tpu_custom_call.1} parent=1 // pred_check_branch
      %95 = sbr.rel (0) target = $region37
    $region36: #{tpu_custom_call.1} parent=1 // pred_region
      %s97 = ssub.s32 2048, 2048
      %98 = vsyncadd [#allocation12], %s97
      %s99 = sshll.u32 [#allocation13], 4
      %s100 = int_to_ptr.vmem [resolvable:$true] %s99
      %105 = dma.hbm_to_vmem [thread:$0]  %s8, 2048, %s100, [#allocation12], 64, 64, 4
    $region37: #{tpu_custom_call.1} parent=1 // pred_fallthru
      _
    // Predicated region
    $region38: #{tpu_custom_call.1} parent=1 // pred_check
      _
    $region39: #{tpu_custom_call.1} parent=1 // pred_check_branch
      %107 = sbr.rel (0) target = $region41
    $region40: #{tpu_custom_call.1} parent=1 // pred_region
      _
    $region41: #{tpu_custom_call.1} parent=1 // pred_fallthru
      _
    // Predicated region
    $region42: #{tpu_custom_call.1} parent=1 // pred_check
      _
    $region43: #{tpu_custom_call.1} parent=1 // pred_check_branch
      %109 = sbr.rel (0) target = $region45
    $region44: #{tpu_custom_call.1} parent=1 // pred_region
      _
    $region45: #{tpu_custom_call.1} parent=1 // pred_fallthru
      _
    // Predicated region
    $region46: #{tpu_custom_call.1} parent=1 // pred_check
      _
    $region47: #{tpu_custom_call.1} parent=1 // pred_check_branch
      %111 = sbr.rel (0) target = $region49
    $region48: #{tpu_custom_call.1} parent=1 // pred_region
      %112 = dma.done [#allocation3], 128
    $region49: #{tpu_custom_call.1} parent=1 // pred_fallthru
      _
    // Predicated region
    $region50: #{tpu_custom_call.1} parent=1 // pred_check
      _
    $region51: #{tpu_custom_call.1} parent=1 // pred_check_branch
      %114 = sbr.rel (0) target = $region53
    $region52: #{tpu_custom_call.1} parent=1 // pred_region
      %115 = dma.done [#allocation6], 128
    $region53: #{tpu_custom_call.1} parent=1 // pred_fallthru
      _
    // Predicated region
    $region54: #{tpu_custom_call.1} parent=1 // pred_check
      _
    $region55: #{tpu_custom_call.1} parent=1 // pred_check_branch
      %117 = sbr.rel (0) target = $region57
    $region56: #{tpu_custom_call.1} parent=1 // pred_region
      %118 = dma.done [#allocation6], 128
    $region57: #{tpu_custom_call.1} parent=1 // pred_fallthru
      _
    // Predicated region
    $region58: #{tpu_custom_call.1} parent=1 // pred_check
      _
    $region59: #{tpu_custom_call.1} parent=1 // pred_check_branch
      %120 = sbr.rel (0) target = $region61
    $region60: #{tpu_custom_call.1} parent=1 // pred_region
      %121 = dma.done [#allocation9], 2048
    $region61: #{tpu_custom_call.1} parent=1 // pred_fallthru
      _
    // Predicated region
    $region62: #{tpu_custom_call.1} parent=1 // pred_check
      _
    $region63: #{tpu_custom_call.1} parent=1 // pred_check_branch
      %123 = sbr.rel (0) target = $region65
    $region64: #{tpu_custom_call.1} parent=1 // pred_region
      %124 = dma.done [#allocation9], 1024
    $region65: #{tpu_custom_call.1} parent=1 // pred_fallthru
      _
    // Predicated region
    $region66: #{tpu_custom_call.1} parent=1 // pred_check
      _
    $region67: #{tpu_custom_call.1} parent=1 // pred_check_branch
      %126 = sbr.rel (0) target = $region69
    $region68: #{tpu_custom_call.1} parent=1 // pred_region
      %127 = dma.done [#allocation12], 4096
    $region69: #{tpu_custom_call.1} parent=1 // pred_fallthru
      _
    // Predicated region
    $region70: #{tpu_custom_call.1} parent=1 // pred_check
      _
    $region71: #{tpu_custom_call.1} parent=1 // pred_check_branch
      %129 = sbr.rel (0) target = $region73
    $region72: #{tpu_custom_call.1} parent=1 // pred_region
      %130 = dma.done [#allocation12], 2048
    $region73: #{tpu_custom_call.1} parent=1 // pred_fallthru
      _
    %v132 = vld [vmem:[#allocation2] sm:$0xff]
    %v133 = vld [vmem:[%s9] sm:$0x1]
    %v134 = vmul.f32 %v132, %v132
    %135 = vadd.xlane.f32.xlu0 %v134
    %v136 = vpop.xlane.xlu0 %135
    %v137 = vrcp.pop 128.0
    %v138 = vmul.f32 %v136, %v137
    %v139 = vadd.f32 %v138, 1e-06
    %v140 = vrsqrt.pop %v139
    %v141 = vmul.f32 %v132, %v140
    %v143 = vlaneseq
    %v144 = vshrl.u32 %v143, 7
    %v145 = vsub.s32 0, %v144
    %v146 = vrot.slane %v133, %v145
    %v148 = vmul.f32 %v141, %v146
    %v149 = vpack.c.bf16 %v148, %v148
    %v150 = vld [vmem:[#allocation8] sm:$0xff]
    %v151 = vld [vmem:[#allocation8 + $0x8] sm:$0xff]
    %v152 = vld [vmem:[#allocation8 + $0x10] sm:$0xff]
    %v153 = vld [vmem:[#allocation8 + $0x18] sm:$0xff]
    %v154 = vld [vmem:[#allocation8 + $0x20] sm:$0xff]
    %v155 = vld [vmem:[#allocation8 + $0x28] sm:$0xff]
    %v156 = vld [vmem:[#allocation8 + $0x30] sm:$0xff]
    %v157 = vld [vmem:[#allocation8 + $0x38] sm:$0xff]
    %v158 = vld [vmem:[#allocation8 + $0x40] sm:$0xff]
    %v159 = vld [vmem:[#allocation8 + $0x48] sm:$0xff]
    %v160 = vld [vmem:[#allocation8 + $0x50] sm:$0xff]
    %v161 = vld [vmem:[#allocation8 + $0x58] sm:$0xff]
    %v162 = vld [vmem:[#allocation8 + $0x60] sm:$0xff]
    %v163 = vld [vmem:[#allocation8 + $0x68] sm:$0xff]
    %v164 = vld [vmem:[#allocation8 + $0x70] sm:$0xff]
    %v165 = vld [vmem:[#allocation8 + $0x78] sm:$0xff]
    %v182 = vunpack.c.l.b16 %v150
    %v183 = vunpack.c.h.b16 %v150
    %v184 = vunpack.c.l.b16 %v151
    %v185 = vunpack.c.h.b16 %v151
    %v186 = vunpack.c.l.b16 %v152
    %v187 = vunpack.c.h.b16 %v152
    %v188 = vunpack.c.l.b16 %v153
    %v189 = vunpack.c.h.b16 %v153
    %v190 = vunpack.c.l.b16 %v154
    %v191 = vunpack.c.h.b16 %v154
    %v192 = vunpack.c.l.b16 %v155
    %v193 = vunpack.c.h.b16 %v155
    %v194 = vunpack.c.l.b16 %v156
    %v195 = vunpack.c.h.b16 %v156
    %v196 = vunpack.c.l.b16 %v157
    %v197 = vunpack.c.h.b16 %v157
    %v198 = vunpack.c.l.b16 %v158
    %v199 = vunpack.c.h.b16 %v158
    %v200 = vunpack.c.l.b16 %v159
    %v201 = vunpack.c.h.b16 %v159
    %v202 = vunpack.c.l.b16 %v160
    %v203 = vunpack.c.h.b16 %v160
    %v204 = vunpack.c.l.b16 %v161
    %v205 = vunpack.c.h.b16 %v161
    %v206 = vunpack.c.l.b16 %v162
    %v207 = vunpack.c.h.b16 %v162
    %v208 = vunpack.c.l.b16 %v163
    %v209 = vunpack.c.h.b16 %v163
    %v210 = vunpack.c.l.b16 %v164
    %v211 = vunpack.c.h.b16 %v164
    %v212 = vunpack.c.l.b16 %v165
    %v213 = vunpack.c.h.b16 %v165
    %v214 = vpack.c.b16 %v184, %v182
    %v215 = vpack.c.b16 %v185, %v183
    %v216 = vpack.c.b16 %v188, %v186
    %v217 = vpack.c.b16 %v189, %v187
    %v218 = vpack.c.b16 %v192, %v190
    %v219 = vpack.c.b16 %v193, %v191
    %v220 = vpack.c.b16 %v196, %v194
    %v221 = vpack.c.b16 %v197, %v195
    %v222 = vpack.c.b16 %v200, %v198
    %v223 = vpack.c.b16 %v201, %v199
    %v224 = vpack.c.b16 %v204, %v202
    %v225 = vpack.c.b16 %v205, %v203
    %v226 = vpack.c.b16 %v208, %v206
    %v227 = vpack.c.b16 %v209, %v207
    %v228 = vpack.c.b16 %v212, %v210
    %v229 = vpack.c.b16 %v213, %v211
    %246 = vmatprep.subr.bf16.mxu0 %v215
    %247 = vmatpush1.bf16.msra.mxu0 %v214
    %248 = vmatprep.subr.bf16.mxu0 %v217
    %249 = vmatpush1.bf16.msra.mxu0 %v216
    %250 = vmatprep.subr.bf16.mxu0 %v219
    %251 = vmatpush1.bf16.msra.mxu0 %v218
    %252 = vmatprep.subr.bf16.mxu0 %v221
    %253 = vmatpush1.bf16.msra.mxu0 %v220
    %254 = vmatprep.subr.bf16.mxu0 %v223
    %255 = vmatpush1.bf16.msra.mxu0 %v222
    %256 = vmatprep.subr.bf16.mxu0 %v225
    %257 = vmatpush1.bf16.msra.mxu0 %v224
    %258 = vmatprep.subr.bf16.mxu0 %v227
    %259 = vmatpush1.bf16.msra.mxu0 %v226
    %260 = vmatprep.subr.bf16.mxu0 %v229
    %261 = vmatpush1.bf16.msra.mxu0 %v228
    %262 = vmatprep.subr.bf16.mxu0 0
    %263 = vmatpush1.bf16.msra.mxu0 0
    %264 = vmatprep.subr.bf16.mxu0 0
    %265 = vmatpush1.bf16.msra.mxu0 0
    %266 = vmatprep.subr.bf16.mxu0 0
    %267 = vmatpush1.bf16.msra.mxu0 0
    %268 = vmatprep.subr.bf16.mxu0 0
    %269 = vmatpush1.bf16.msra.mxu0 0
    %270 = vmatprep.subr.bf16.mxu0 0
    %271 = vmatpush1.bf16.msra.mxu0 0
    %272 = vmatprep.subr.bf16.mxu0 0
    %273 = vmatpush1.bf16.msra.mxu0 0
    %274 = vmatprep.subr.bf16.mxu0 0
    %275 = vmatpush1.bf16.msra.mxu0 0
    %276 = vmatprep.subr.bf16.mxu0 0
    %277 = vmatpush1.bf16.msra.mxu0 0
    %278 = vmatprep.mubr.bf16.mxu0 0
    %279 = vmatmul.mubr.bf16.gmra.mrb[0].mxu0 %v149
    %v280 = vpop.f32.mrb[0].mxu0
    %v281 = vadd.f32 0.0, %v280
    %v282 = vpop.f32.mrb[0].mxu0
    %v283 = vadd.f32 0.0, %v282
    %v284 = vpop.f32.mrb[0].mxu0
    %v285 = vpop.f32.mrb[0].mxu0
    %286 = vdwg.mxu0
    %v287 = vld [vmem:[#allocation5] sm:$0xff]
    %v288 = vld [vmem:[#allocation7] sm:$0xff]
    %290 = vrot.lane.b32.xlu0 %v287, 32
    %v291 = vpop.permute.xlu0 %290
    %293 = vrot.lane.b32.xlu0 %v287, 64
    %v294 = vpop.permute.xlu0 %293
    %296 = vrot.lane.b32.xlu0 %v287, 96
    %v297 = vpop.permute.xlu0 %296
    %vm299 = vcmask 261120
    %v300 = vsel %vm299, %v287, %v291
    %vm301 = vcmask 523264
    %v302 = vsel %vm301, %v300, %v294
    %vm303 = vcmask 785408
    %v304 = vsel %vm303, %v302, %v297
    %v305 = vsel %vm301, %v300, 1.0
    %307 = vrot.lane.b32.xlu0 %v288, 32
    %v308 = vpop.permute.xlu0 %307
    %310 = vrot.lane.b32.xlu0 %v288, 64
    %v311 = vpop.permute.xlu0 %310
    %313 = vrot.lane.b32.xlu0 %v288, 96
    %v314 = vpop.permute.xlu0 %313
    %v316 = vsel %vm299, %v288, %v308
    %v317 = vsel %vm301, %v316, %v311
    %v318 = vsel %vm303, %v317, %v314
    %v319 = vsel %vm301, %v316, 0.0
    %v320 = vlaneseq
    %v321 = vand.u32 %v320, 127
    %v322 = vadd.s32 %v321, 128
    %vm323 = vcmp.lt.s32.totalorder %v321, 0
    %v324 = vsub.s32 0, %v321
    %v325 = vsel %vm323, %v324, %v321
    %v326 = vshrl.u32 %v325, 5
    %v327 = vand.u32 %v325, 31
    %v328 = vsub.s32 0, %v327
    %v329 = vsel %vm323, %v328, %v327
    %vm330 = vcmp.lt.s32.totalorder %v322, 0
    %v331 = vsub.s32 0, %v322
    %v332 = vsel %vm330, %v331, %v322
    %v333 = vshrl.u32 %v332, 5
    %v334 = vand.u32 %v332, 31
    %v335 = vsub.s32 0, %v334
    %v336 = vsel %vm330, %v335, %v334
    %vm337 = vcmp.ne.s32.totalorder %v329, 0
    %vm338 = vcmp.ne.s32.totalorder %v336, 0
    %vm339 = vcmp.lt.s32.totalorder %v329, 0
    %vm340 = vcmp.lt.s32.totalorder %v336, 0
    %vm341 = vmand %vm339, %vm337
    %vm342 = vmand %vm340, %vm338
    %v343 = vadd.s32 %v329, 32
    %v344 = vadd.s32 %v336, 32
    %v345 = vsel %vm341, %v343, %v329
    %v346 = vsel %vm342, %v344, %v336
    %vm347 = vcmp.lt.s32.totalorder %v345, 16
    %vm348 = vcmp.lt.s32.totalorder %v346, 16
    %349 = vrot.lane.b32.xlu0 %v281, 16
    %v350 = vpop.permute.xlu0 %349
    %351 = vrot.lane.b32.xlu0 %v283, 16
    %v352 = vpop.permute.xlu0 %351
    %vm353 = vcmp.lt.s32.totalorder %v321, 16
    %v354 = vsel %vm353, %v350, %v352
    %v355 = vsel %vm353, %v352, %v350
    %356 = vrot.lane.b32.xlu0 %v281, 112
    %v357 = vpop.permute.xlu0 %356
    %358 = vrot.lane.b32.xlu0 %v283, 112
    %v359 = vpop.permute.xlu0 %358
    %vm360 = vcmp.lt.s32.totalorder %v321, 112
    %v361 = vsel %vm360, %v357, %v359
    %v362 = vsel %vm360, %v359, %v357
    %v363 = vsub.f32 0.0, %v361
    %v364 = vsub.f32 0.0, %v362
    %v365 = vsel %vm347, %v363, %v355
    %v366 = vsel %vm348, %v364, %v354
    %v367 = vmul.f32 %v281, %v304
    %v368 = vmul.f32 %v283, %v305
    %v369 = vmul.f32 %v365, %v318
    %v370 = vmul.f32 %v366, %v319
    %v371 = vadd.f32 %v367, %v369
    %v372 = vadd.f32 %v368, %v370
    %v373 = vlaneseq
    %v374 = vshrl.u32 %v373, 7
    %vm375 = vcmp.ge.s32.totalorder %v374, %v321
    %v376 = vld [vmem:[%s4] sm:$0x1]
    %v377 = vld [vmem:[%s5] sm:$0x1]
    %v378 = vmul.f32 %v372, %v372
    %v379 = vsel %vm299, %v378, 0.0
    %380 = vadd.xlane.f32.xlu0 %v379
    %v381 = vpop.xlane.xlu0 %380
    %v382 = vrcp.pop 32.0
    %v383 = vmul.f32 %v381, %v382
    %v384 = vadd.f32 %v383, 1e-06
    %v385 = vrsqrt.pop %v384
    %v386 = vmul.f32 %v372, %v385
    %v388 = vlaneseq
    %v389 = vshrl.u32 %v388, 7
    %v390 = vsub.s32 0, %v389
    %v391 = vrot.slane %v377, %v390
    %v393 = vmul.f32 %v386, %v391
    %v394 = vpack.c.bf16 %v393, %v393
    %v395 = vpack.c.bf16 %v372, %v372
    %v396 = vmul.f32 %v371, %v371
    %v397 = vsel %vm299, %v396, 0.0
    %398 = vadd.xlane.f32.xlu0 %v397
    %v399 = vpop.xlane.xlu0 %398
    %v400 = vmul.f32 %v399, %v382
    %v401 = vadd.f32 %v400, 1e-06
    %v402 = vrsqrt.pop %v401
    %v403 = vmul.f32 %v371, %v402
    %v405 = vlaneseq
    %v406 = vshrl.u32 %v405, 7
    %v407 = vsub.s32 0, %v406
    %v408 = vrot.slane %v376, %v407
    %v410 = vmul.f32 %v403, %v408
    %v411 = vpack.c.bf16 %v410, %v410
    %v413 = vsel %vm299, %v411, 0
    %v416 = vsel %vm299, %v394, 0
    %418 = vmatprep.subr.bf16.mxu0 0
    %419 = vmatpush1.bf16.xpose.msra.mxu0 %v416
    %420 = vmatprep.subr.bf16.mxu0 0
    %421 = vmatpush1.bf16.xpose.msra.mxu0 0
    %422 = vmatprep.subr.bf16.mxu0 0
    %423 = vmatpush1.bf16.xpose.msra.mxu0 0
    %424 = vmatprep.subr.bf16.mxu0 0
    %425 = vmatpush1.bf16.xpose.msra.mxu0 0
    %426 = vmatprep.subr.bf16.mxu0 0
    %427 = vmatpush1.bf16.xpose.msra.mxu0 0
    %428 = vmatprep.subr.bf16.mxu0 0
    %429 = vmatpush1.bf16.xpose.msra.mxu0 0
    %430 = vmatprep.subr.bf16.mxu0 0
    %431 = vmatpush1.bf16.xpose.msra.mxu0 0
    %432 = vmatprep.subr.bf16.mxu0 0
    %433 = vmatpush1.bf16.xpose.msra.mxu0 0
    %434 = vmatprep.subr.bf16.mxu0 0
    %435 = vmatpush1.bf16.xpose.msra.mxu0 0
    %436 = vmatprep.subr.bf16.mxu0 0
    %437 = vmatpush1.bf16.xpose.msra.mxu0 0
    %438 = vmatprep.subr.bf16.mxu0 0
    %439 = vmatpush1.bf16.xpose.msra.mxu0 0
    %440 = vmatprep.subr.bf16.mxu0 0
    %441 = vmatpush1.bf16.xpose.msra.mxu0 0
    %442 = vmatprep.subr.bf16.mxu0 0
    %443 = vmatpush1.bf16.xpose.msra.mxu0 0
    %444 = vmatprep.subr.bf16.mxu0 0
    %445 = vmatpush1.bf16.xpose.msra.mxu0 0
    %446 = vmatprep.subr.bf16.mxu0 0
    %447 = vmatpush1.bf16.xpose.msra.mxu0 0
    %448 = vmatprep.subr.bf16.mxu0 0
    %449 = vmatpush1.bf16.xpose.msra.mxu0 0
    %450 = vmatprep.mubr.bf16.mxu0 0
    %451 = vmatmul.mubr.bf16.gmra.mrb[0].mxu0 %v413
    %v452 = vpop.f32.mrb[0].mxu0
    %v453 = vadd.f32 0.0, %v452
    %v454 = vpop.f32.mrb[0].mxu0
    %v455 = vpop.f32.mrb[0].mxu0
    %v456 = vpop.f32.mrb[0].mxu0
    %457 = vdwg.mxu0
    %v458 = vmul.f32 %v453, 0.17677669
    %v459 = vsel %vm375, %v458, -1e+30
    %vm460 = vcmask 64512
    %v461 = vsel %vm460, %v459, -inf
    %462 = vmax.xlane.f32.xlu0 %v461
    %v463 = vpop.xlane.xlu0 %462
    %v464 = vsub.f32 %v459, %v463
    %v465 = vmul.f32 %v464, 1.442695
    %v466 = vpow.pop %v465
    %v467 = vsel %vm460, %v466, 0.0
    %468 = vadd.xlane.f32.xlu0 %v467
    %v469 = vpop.xlane.xlu0 %468
    %v470 = vpack.c.bf16 %v466, %v466
    %472 = vrot.lane.b32.xlu0 %v395, 64
    %v473 = vpop.permute.xlu0 %472
    %v475 = vsel %vm460, %v470, 0
    %vm477 = vcmask 1043456
    %v479 = vsel %vm477, %v473, 0
    %481 = vmatprep.subr.bf16.mxu0 0
    %482 = vmatpush1.bf16.msra.mxu0 %v479
    %483 = vmatprep.subr.bf16.mxu0 0
    %484 = vmatpush1.bf16.msra.mxu0 0
    %485 = vmatprep.subr.bf16.mxu0 0
    %486 = vmatpush1.bf16.msra.mxu0 0
    %487 = vmatprep.subr.bf16.mxu0 0
    %488 = vmatpush1.bf16.msra.mxu0 0
    %489 = vmatprep.subr.bf16.mxu0 0
    %490 = vmatpush1.bf16.msra.mxu0 0
    %491 = vmatprep.subr.bf16.mxu0 0
    %492 = vmatpush1.bf16.msra.mxu0 0
    %493 = vmatprep.subr.bf16.mxu0 0
    %494 = vmatpush1.bf16.msra.mxu0 0
    %495 = vmatprep.subr.bf16.mxu0 0
    %496 = vmatpush1.bf16.msra.mxu0 0
    %497 = vmatprep.subr.bf16.mxu0 0
    %498 = vmatpush1.bf16.msra.mxu0 0
    %499 = vmatprep.subr.bf16.mxu0 0
    %500 = vmatpush1.bf16.msra.mxu0 0
    %501 = vmatprep.subr.bf16.mxu0 0
    %502 = vmatpush1.bf16.msra.mxu0 0
    %503 = vmatprep.subr.bf16.mxu0 0
    %504 = vmatpush1.bf16.msra.mxu0 0
    %505 = vmatprep.subr.bf16.mxu0 0
    %506 = vmatpush1.bf16.msra.mxu0 0
    %507 = vmatprep.subr.bf16.mxu0 0
    %508 = vmatpush1.bf16.msra.mxu0 0
    %509 = vmatprep.subr.bf16.mxu0 0
    %510 = vmatpush1.bf16.msra.mxu0 0
    %511 = vmatprep.subr.bf16.mxu0 0
    %512 = vmatpush1.bf16.msra.mxu0 0
    %513 = vmatprep.mubr.bf16.mxu0 0
    %514 = vmatmul.mubr.bf16.gmra.mrb[0].mxu0 %v475
    %v515 = vpop.f32.mrb[0].mxu0
    %v516 = vadd.f32 0.0, %v515
    %v517 = vpop.f32.mrb[0].mxu0
    %v518 = vpop.f32.mrb[0].mxu0
    %v519 = vpop.f32.mrb[0].mxu0
    %520 = vdwg.mxu0
    %v521 = vrcp.pop %v469
    %v522 = vmul.f32 %v516, %v521
    %524 = vrot.lane.b32.xlu0 %v396, 96
    %v525 = vpop.permute.xlu0 %524
    %v527 = vsel %vm299, %v525, 0.0
    %528 = vadd.xlane.f32.xlu0 %v527
    %v529 = vpop.xlane.xlu0 %528
    %v530 = vmul.f32 %v529, %v382
    %v531 = vadd.f32 %v530, 1e-06
    %v532 = vrsqrt.pop %v531
    %v533 = vmul.f32 %v371, %v532
    %534 = vrot.lane.b32.xlu0 %v408, 32
    %v535 = vpop.permute.xlu0 %534
    %v537 = vmul.f32 %v533, %v535
    %v538 = vpack.c.bf16 %v537, %v537
    %540 = vrot.lane.b32.xlu0 %v538, 96
    %v541 = vpop.permute.xlu0 %540
    %v543 = vsel %vm299, %v541, 0
    %545 = vmatprep.subr.bf16.mxu0 0
    %546 = vmatpush1.bf16.xpose.msra.mxu0 %v416
    %547 = vmatprep.subr.bf16.mxu0 0
    %548 = vmatpush1.bf16.xpose.msra.mxu0 0
    %549 = vmatprep.subr.bf16.mxu0 0
    %550 = vmatpush1.bf16.xpose.msra.mxu0 0
    %551 = vmatprep.subr.bf16.mxu0 0
    %552 = vmatpush1.bf16.xpose.msra.mxu0 0
    %553 = vmatprep.subr.bf16.mxu0 0
    %554 = vmatpush1.bf16.xpose.msra.mxu0 0
    %555 = vmatprep.subr.bf16.mxu0 0
    %556 = vmatpush1.bf16.xpose.msra.mxu0 0
    %557 = vmatprep.subr.bf16.mxu0 0
    %558 = vmatpush1.bf16.xpose.msra.mxu0 0
    %559 = vmatprep.subr.bf16.mxu0 0
    %560 = vmatpush1.bf16.xpose.msra.mxu0 0
    %561 = vmatprep.subr.bf16.mxu0 0
    %562 = vmatpush1.bf16.xpose.msra.mxu0 0
    %563 = vmatprep.subr.bf16.mxu0 0
    %564 = vmatpush1.bf16.xpose.msra.mxu0 0
    %565 = vmatprep.subr.bf16.mxu0 0
    %566 = vmatpush1.bf16.xpose.msra.mxu0 0
    %567 = vmatprep.subr.bf16.mxu0 0
    %568 = vmatpush1.bf16.xpose.msra.mxu0 0
    %569 = vmatprep.subr.bf16.mxu0 0
    %570 = vmatpush1.bf16.xpose.msra.mxu0 0
    %571 = vmatprep.subr.bf16.mxu0 0
    %572 = vmatpush1.bf16.xpose.msra.mxu0 0
    %573 = vmatprep.subr.bf16.mxu0 0
    %574 = vmatpush1.bf16.xpose.msra.mxu0 0
    %575 = vmatprep.subr.bf16.mxu0 0
    %576 = vmatpush1.bf16.xpose.msra.mxu0 0
    %577 = vmatprep.mubr.bf16.mxu0 0
    %578 = vmatmul.mubr.bf16.gmra.mrb[0].mxu0 %v543
    %v579 = vpop.f32.mrb[0].mxu0
    %v580 = vadd.f32 0.0, %v579
    %v581 = vpop.f32.mrb[0].mxu0
    %v582 = vpop.f32.mrb[0].mxu0
    %v583 = vpop.f32.mrb[0].mxu0
    %584 = vdwg.mxu0
    %v585 = vmul.f32 %v580, 0.17677669
    %v586 = vsel %vm375, %v585, -1e+30
    %v587 = vsel %vm460, %v586, -inf
    %588 = vmax.xlane.f32.xlu0 %v587
    %v589 = vpop.xlane.xlu0 %588
    %v590 = vsub.f32 %v586, %v589
    %v591 = vmul.f32 %v590, 1.442695
    %v592 = vpow.pop %v591
    %v593 = vsel %vm460, %v592, 0.0
    %594 = vadd.xlane.f32.xlu0 %v593
    %v595 = vpop.xlane.xlu0 %594
    %v596 = vpack.c.bf16 %v592, %v592
    %v598 = vsel %vm460, %v596, 0
    %600 = vmatprep.subr.bf16.mxu0 0
    %601 = vmatpush1.bf16.msra.mxu0 %v479
    %602 = vmatprep.subr.bf16.mxu0 0
    %603 = vmatpush1.bf16.msra.mxu0 0
    %604 = vmatprep.subr.bf16.mxu0 0
    %605 = vmatpush1.bf16.msra.mxu0 0
    %606 = vmatprep.subr.bf16.mxu0 0
    %607 = vmatpush1.bf16.msra.mxu0 0
    %608 = vmatprep.subr.bf16.mxu0 0
    %609 = vmatpush1.bf16.msra.mxu0 0
    %610 = vmatprep.subr.bf16.mxu0 0
    %611 = vmatpush1.bf16.msra.mxu0 0
    %612 = vmatprep.subr.bf16.mxu0 0
    %613 = vmatpush1.bf16.msra.mxu0 0
    %614 = vmatprep.subr.bf16.mxu0 0
    %615 = vmatpush1.bf16.msra.mxu0 0
    %616 = vmatprep.subr.bf16.mxu0 0
    %617 = vmatpush1.bf16.msra.mxu0 0
    %618 = vmatprep.subr.bf16.mxu0 0
    %619 = vmatpush1.bf16.msra.mxu0 0
    %620 = vmatprep.subr.bf16.mxu0 0
    %621 = vmatpush1.bf16.msra.mxu0 0
    %622 = vmatprep.subr.bf16.mxu0 0
    %623 = vmatpush1.bf16.msra.mxu0 0
    %624 = vmatprep.subr.bf16.mxu0 0
    %625 = vmatpush1.bf16.msra.mxu0 0
    %626 = vmatprep.subr.bf16.mxu0 0
    %627 = vmatpush1.bf16.msra.mxu0 0
    %628 = vmatprep.subr.bf16.mxu0 0
    %629 = vmatpush1.bf16.msra.mxu0 0
    %630 = vmatprep.subr.bf16.mxu0 0
    %631 = vmatpush1.bf16.msra.mxu0 0
    %632 = vmatprep.mubr.bf16.mxu0 0
    %633 = vmatmul.mubr.bf16.gmra.mrb[0].mxu0 %v598
    %v634 = vpop.f32.mrb[0].mxu0
    %v635 = vadd.f32 0.0, %v634
    %v636 = vpop.f32.mrb[0].mxu0
    %v637 = vpop.f32.mrb[0].mxu0
    %v638 = vpop.f32.mrb[0].mxu0
    %639 = vdwg.mxu0
    %v640 = vrcp.pop %v595
    %v641 = vmul.f32 %v635, %v640
    %643 = vrot.lane.b32.xlu0 %v378, 96
    %v644 = vpop.permute.xlu0 %643
    %v646 = vsel %vm299, %v644, 0.0
    %647 = vadd.xlane.f32.xlu0 %v646
    %v648 = vpop.xlane.xlu0 %647
    %v649 = vmul.f32 %v648, %v382
    %v650 = vadd.f32 %v649, 1e-06
    %v651 = vrsqrt.pop %v650
    %v652 = vmul.f32 %v372, %v651
    %653 = vrot.lane.b32.xlu0 %v391, 32
    %v654 = vpop.permute.xlu0 %653
    %v656 = vmul.f32 %v652, %v654
    %v657 = vpack.c.bf16 %v656, %v656
    %658 = vrot.lane.b32.xlu0 %v396, 64
    %v659 = vpop.permute.xlu0 %658
    %v661 = vsel %vm299, %v659, 0.0
    %662 = vadd.xlane.f32.xlu0 %v661
    %v663 = vpop.xlane.xlu0 %662
    %v664 = vmul.f32 %v663, %v382
    %v665 = vadd.f32 %v664, 1e-06
    %v666 = vrsqrt.pop %v665
    %v667 = vmul.f32 %v371, %v666
    %668 = vrot.lane.b32.xlu0 %v408, 64
    %v669 = vpop.permute.xlu0 %668
    %v671 = vmul.f32 %v667, %v669
    %v672 = vpack.c.bf16 %v671, %v671
    %674 = vrot.lane.b32.xlu0 %v672, 64
    %v675 = vpop.permute.xlu0 %674
    %677 = vrot.lane.b32.xlu0 %v657, 96
    %v678 = vpop.permute.xlu0 %677
    %v680 = vsel %vm299, %v675, 0
    %v683 = vsel %vm299, %v678, 0
    %685 = vmatprep.subr.bf16.mxu0 0
    %686 = vmatpush1.bf16.xpose.msra.mxu0 %v683
    %687 = vmatprep.subr.bf16.mxu0 0
    %688 = vmatpush1.bf16.xpose.msra.mxu0 0
    %689 = vmatprep.subr.bf16.mxu0 0
    %690 = vmatpush1.bf16.xpose.msra.mxu0 0
    %691 = vmatprep.subr.bf16.mxu0 0
    %692 = vmatpush1.bf16.xpose.msra.mxu0 0
    %693 = vmatprep.subr.bf16.mxu0 0
    %694 = vmatpush1.bf16.xpose.msra.mxu0 0
    %695 = vmatprep.subr.bf16.mxu0 0
    %696 = vmatpush1.bf16.xpose.msra.mxu0 0
    %697 = vmatprep.subr.bf16.mxu0 0
    %698 = vmatpush1.bf16.xpose.msra.mxu0 0
    %699 = vmatprep.subr.bf16.mxu0 0
    %700 = vmatpush1.bf16.xpose.msra.mxu0 0
    %701 = vmatprep.subr.bf16.mxu0 0
    %702 = vmatpush1.bf16.xpose.msra.mxu0 0
    %703 = vmatprep.subr.bf16.mxu0 0
    %704 = vmatpush1.bf16.xpose.msra.mxu0 0
    %705 = vmatprep.subr.bf16.mxu0 0
    %706 = vmatpush1.bf16.xpose.msra.mxu0 0
    %707 = vmatprep.subr.bf16.mxu0 0
    %708 = vmatpush1.bf16.xpose.msra.mxu0 0
    %709 = vmatprep.subr.bf16.mxu0 0
    %710 = vmatpush1.bf16.xpose.msra.mxu0 0
    %711 = vmatprep.subr.bf16.mxu0 0
    %712 = vmatpush1.bf16.xpose.msra.mxu0 0
    %713 = vmatprep.subr.bf16.mxu0 0
    %714 = vmatpush1.bf16.xpose.msra.mxu0 0
    %715 = vmatprep.subr.bf16.mxu0 0
    %716 = vmatpush1.bf16.xpose.msra.mxu0 0
    %717 = vmatprep.mubr.bf16.mxu0 0
    %718 = vmatmul.mubr.bf16.gmra.mrb[0].mxu0 %v680
    %v719 = vpop.f32.mrb[0].mxu0
    %v720 = vadd.f32 0.0, %v719
    %v721 = vpop.f32.mrb[0].mxu0
    %v722 = vpop.f32.mrb[0].mxu0
    %v723 = vpop.f32.mrb[0].mxu0
    %724 = vdwg.mxu0
    %v725 = vmul.f32 %v720, 0.17677669
    %v726 = vsel %vm375, %v725, -1e+30
    %v727 = vsel %vm460, %v726, -inf
    %728 = vmax.xlane.f32.xlu0 %v727
    %v729 = vpop.xlane.xlu0 %728
    %v730 = vsub.f32 %v726, %v729
    %v731 = vmul.f32 %v730, 1.442695
    %v732 = vpow.pop %v731
    %v733 = vsel %vm460, %v732, 0.0
    %734 = vadd.xlane.f32.xlu0 %v733
    %v735 = vpop.xlane.xlu0 %734
    %v736 = vpack.c.bf16 %v732, %v732
    %737 = vrot.lane.b32.xlu0 %v395, 32
    %v738 = vpop.permute.xlu0 %737
    %v740 = vsel %vm460, %v736, 0
    %v743 = vsel %vm477, %v738, 0
    %745 = vmatprep.subr.bf16.mxu0 0
    %746 = vmatpush1.bf16.msra.mxu0 %v743
    %747 = vmatprep.subr.bf16.mxu0 0
    %748 = vmatpush1.bf16.msra.mxu0 0
    %749 = vmatprep.subr.bf16.mxu0 0
    %750 = vmatpush1.bf16.msra.mxu0 0
    %751 = vmatprep.subr.bf16.mxu0 0
    %752 = vmatpush1.bf16.msra.mxu0 0
    %753 = vmatprep.subr.bf16.mxu0 0
    %754 = vmatpush1.bf16.msra.mxu0 0
    %755 = vmatprep.subr.bf16.mxu0 0
    %756 = vmatpush1.bf16.msra.mxu0 0
    %757 = vmatprep.subr.bf16.mxu0 0
    %758 = vmatpush1.bf16.msra.mxu0 0
    %759 = vmatprep.subr.bf16.mxu0 0
    %760 = vmatpush1.bf16.msra.mxu0 0
    %761 = vmatprep.subr.bf16.mxu0 0
    %762 = vmatpush1.bf16.msra.mxu0 0
    %763 = vmatprep.subr.bf16.mxu0 0
    %764 = vmatpush1.bf16.msra.mxu0 0
    %765 = vmatprep.subr.bf16.mxu0 0
    %766 = vmatpush1.bf16.msra.mxu0 0
    %767 = vmatprep.subr.bf16.mxu0 0
    %768 = vmatpush1.bf16.msra.mxu0 0
    %769 = vmatprep.subr.bf16.mxu0 0
    %770 = vmatpush1.bf16.msra.mxu0 0
    %771 = vmatprep.subr.bf16.mxu0 0
    %772 = vmatpush1.bf16.msra.mxu0 0
    %773 = vmatprep.subr.bf16.mxu0 0
    %774 = vmatpush1.bf16.msra.mxu0 0
    %775 = vmatprep.subr.bf16.mxu0 0
    %776 = vmatpush1.bf16.msra.mxu0 0
    %777 = vmatprep.mubr.bf16.mxu0 0
    %778 = vmatmul.mubr.bf16.gmra.mrb[0].mxu0 %v740
    %v779 = vpop.f32.mrb[0].mxu0
    %v780 = vadd.f32 0.0, %v779
    %v781 = vpop.f32.mrb[0].mxu0
    %v782 = vpop.f32.mrb[0].mxu0
    %v783 = vpop.f32.mrb[0].mxu0
    %784 = vdwg.mxu0
    %v785 = vrcp.pop %v735
    %v786 = vmul.f32 %v780, %v785
    %787 = vrot.lane.b32.xlu0 %v396, 32
    %v788 = vpop.permute.xlu0 %787
    %v790 = vsel %vm299, %v788, 0.0
    %791 = vadd.xlane.f32.xlu0 %v790
    %v792 = vpop.xlane.xlu0 %791
    %v793 = vmul.f32 %v792, %v382
    %v794 = vadd.f32 %v793, 1e-06
    %v795 = vrsqrt.pop %v794
    %v796 = vmul.f32 %v371, %v795
    %797 = vrot.lane.b32.xlu0 %v408, 96
    %v798 = vpop.permute.xlu0 %797
    %v800 = vmul.f32 %v796, %v798
    %v801 = vpack.c.bf16 %v800, %v800
    %803 = vrot.lane.b32.xlu0 %v801, 32
    %v804 = vpop.permute.xlu0 %803
    %v806 = vsel %vm299, %v804, 0
    %808 = vmatprep.subr.bf16.mxu0 0
    %809 = vmatpush1.bf16.xpose.msra.mxu0 %v683
    %810 = vmatprep.subr.bf16.mxu0 0
    %811 = vmatpush1.bf16.xpose.msra.mxu0 0
    %812 = vmatprep.subr.bf16.mxu0 0
    %813 = vmatpush1.bf16.xpose.msra.mxu0 0
    %814 = vmatprep.subr.bf16.mxu0 0
    %815 = vmatpush1.bf16.xpose.msra.mxu0 0
    %816 = vmatprep.subr.bf16.mxu0 0
    %817 = vmatpush1.bf16.xpose.msra.mxu0 0
    %818 = vmatprep.subr.bf16.mxu0 0
    %819 = vmatpush1.bf16.xpose.msra.mxu0 0
    %820 = vmatprep.subr.bf16.mxu0 0
    %821 = vmatpush1.bf16.xpose.msra.mxu0 0
    %822 = vmatprep.subr.bf16.mxu0 0
    %823 = vmatpush1.bf16.xpose.msra.mxu0 0
    %824 = vmatprep.subr.bf16.mxu0 0
    %825 = vmatpush1.bf16.xpose.msra.mxu0 0
    %826 = vmatprep.subr.bf16.mxu0 0
    %827 = vmatpush1.bf16.xpose.msra.mxu0 0
    %828 = vmatprep.subr.bf16.mxu0 0
    %829 = vmatpush1.bf16.xpose.msra.mxu0 0
    %830 = vmatprep.subr.bf16.mxu0 0
    %831 = vmatpush1.bf16.xpose.msra.mxu0 0
    %832 = vmatprep.subr.bf16.mxu0 0
    %833 = vmatpush1.bf16.xpose.msra.mxu0 0
    %834 = vmatprep.subr.bf16.mxu0 0
    %835 = vmatpush1.bf16.xpose.msra.mxu0 0
    %836 = vmatprep.subr.bf16.mxu0 0
    %837 = vmatpush1.bf16.xpose.msra.mxu0 0
    %838 = vmatprep.subr.bf16.mxu0 0
    %839 = vmatpush1.bf16.xpose.msra.mxu0 0
    %840 = vmatprep.mubr.bf16.mxu0 0
    %841 = vmatmul.mubr.bf16.gmra.mrb[0].mxu0 %v806
    %v842 = vpop.f32.mrb[0].mxu0
    %v843 = vadd.f32 0.0, %v842
    %v844 = vpop.f32.mrb[0].mxu0
    %v845 = vpop.f32.mrb[0].mxu0
    %v846 = vpop.f32.mrb[0].mxu0
    %847 = vdwg.mxu0
    %v848 = vmul.f32 %v843, 0.17677669
    %v849 = vsel %vm375, %v848, -1e+30
    %v850 = vsel %vm460, %v849, -inf
    %851 = vmax.xlane.f32.xlu0 %v850
    %v852 = vpop.xlane.xlu0 %851
    %v853 = vsub.f32 %v849, %v852
    %v854 = vmul.f32 %v853, 1.442695
    %v855 = vpow.pop %v854
    %v856 = vsel %vm460, %v855, 0.0
    %857 = vadd.xlane.f32.xlu0 %v856
    %v858 = vpop.xlane.xlu0 %857
    %v859 = vpack.c.bf16 %v855, %v855
    %v861 = vsel %vm460, %v859, 0
    %863 = vmatprep.subr.bf16.mxu0 0
    %864 = vmatpush1.bf16.msra.mxu0 %v743
    %865 = vmatprep.subr.bf16.mxu0 0
    %866 = vmatpush1.bf16.msra.mxu0 0
    %867 = vmatprep.subr.bf16.mxu0 0
    %868 = vmatpush1.bf16.msra.mxu0 0
    %869 = vmatprep.subr.bf16.mxu0 0
    %870 = vmatpush1.bf16.msra.mxu0 0
    %871 = vmatprep.subr.bf16.mxu0 0
    %872 = vmatpush1.bf16.msra.mxu0 0
    %873 = vmatprep.subr.bf16.mxu0 0
    %874 = vmatpush1.bf16.msra.mxu0 0
    %875 = vmatprep.subr.bf16.mxu0 0
    %876 = vmatpush1.bf16.msra.mxu0 0
    %877 = vmatprep.subr.bf16.mxu0 0
    %878 = vmatpush1.bf16.msra.mxu0 0
    %879 = vmatprep.subr.bf16.mxu0 0
    %880 = vmatpush1.bf16.msra.mxu0 0
    %881 = vmatprep.subr.bf16.mxu0 0
    %882 = vmatpush1.bf16.msra.mxu0 0
    %883 = vmatprep.subr.bf16.mxu0 0
    %884 = vmatpush1.bf16.msra.mxu0 0
    %885 = vmatprep.subr.bf16.mxu0 0
    %886 = vmatpush1.bf16.msra.mxu0 0
    %887 = vmatprep.subr.bf16.mxu0 0
    %888 = vmatpush1.bf16.msra.mxu0 0
    %889 = vmatprep.subr.bf16.mxu0 0
    %890 = vmatpush1.bf16.msra.mxu0 0
    %891 = vmatprep.subr.bf16.mxu0 0
    %892 = vmatpush1.bf16.msra.mxu0 0
    %893 = vmatprep.subr.bf16.mxu0 0
    %894 = vmatpush1.bf16.msra.mxu0 0
    %895 = vmatprep.mubr.bf16.mxu0 0
    %896 = vmatmul.mubr.bf16.gmra.mrb[0].mxu0 %v861
    %v897 = vpop.f32.mrb[0].mxu0
    %v898 = vadd.f32 0.0, %v897
    %v899 = vpop.f32.mrb[0].mxu0
    %v900 = vpop.f32.mrb[0].mxu0
    %v901 = vpop.f32.mrb[0].mxu0
    %902 = vdwg.mxu0
    %v903 = vrcp.pop %v858
    %v904 = vmul.f32 %v898, %v903
    %906 = vrot.lane.b32.xlu0 %v641, 32
    %v907 = vpop.permute.xlu0 %906
    %910 = vrot.lane.b32.xlu0 %v786, 64
    %v911 = vpop.permute.xlu0 %910
    %914 = vrot.lane.b32.xlu0 %v904, 96
    %v915 = vpop.permute.xlu0 %914
    %v917 = vsel %vm299, %v522, %v907
    %v918 = vsel %vm301, %v917, %v911
    %v919 = vsel %vm303, %v918, %v915
    %v920 = vpack.c.bf16 %v919, %v919
    %v921 = vld [vmem:[#allocation10] sm:$0xf]
    %v922 = vld [vmem:[#allocation10 + $0x4] sm:$0xf]
    %v923 = vld [vmem:[#allocation10 + $0x8] sm:$0xf]
    %v924 = vld [vmem:[#allocation10 + $0xc] sm:$0xf]
    %v925 = vld [vmem:[#allocation10 + $0x10] sm:$0xf]
    %v926 = vld [vmem:[#allocation10 + $0x14] sm:$0xf]
    %v927 = vld [vmem:[#allocation10 + $0x18] sm:$0xf]
    %v928 = vld [vmem:[#allocation10 + $0x1c] sm:$0xf]
    %v929 = vld [vmem:[#allocation10 + $0x20] sm:$0xf]
    %v930 = vld [vmem:[#allocation10 + $0x24] sm:$0xf]
    %v931 = vld [vmem:[#allocation10 + $0x28] sm:$0xf]
    %v932 = vld [vmem:[#allocation10 + $0x2c] sm:$0xf]
    %v933 = vld [vmem:[#allocation10 + $0x30] sm:$0xf]
    %v934 = vld [vmem:[#allocation10 + $0x34] sm:$0xf]
    %v935 = vld [vmem:[#allocation10 + $0x38] sm:$0xf]
    %v936 = vld [vmem:[#allocation10 + $0x3c] sm:$0xf]
    %v953 = vunpack.c.l.b16 %v921
    %v954 = vunpack.c.l.b16 %v922
    %v955 = vunpack.c.l.b16 %v923
    %v956 = vunpack.c.l.b16 %v924
    %v957 = vunpack.c.l.b16 %v925
    %v958 = vunpack.c.l.b16 %v926
    %v959 = vunpack.c.l.b16 %v927
    %v960 = vunpack.c.l.b16 %v928
    %v961 = vunpack.c.l.b16 %v929
    %v962 = vunpack.c.l.b16 %v930
    %v963 = vunpack.c.l.b16 %v931
    %v964 = vunpack.c.l.b16 %v932
    %v965 = vunpack.c.l.b16 %v933
    %v966 = vunpack.c.l.b16 %v934
    %v967 = vunpack.c.l.b16 %v935
    %v968 = vunpack.c.l.b16 %v936
    %v969 = vpack.c.b16 %v954, %v953
    %v970 = vpack.c.b16 %v956, %v955
    %v971 = vpack.c.b16 %v958, %v957
    %v972 = vpack.c.b16 %v960, %v959
    %v973 = vpack.c.b16 %v962, %v961
    %v974 = vpack.c.b16 %v964, %v963
    %v975 = vpack.c.b16 %v966, %v965
    %v976 = vpack.c.b16 %v968, %v967
    %985 = vmatprep.subr.bf16.mxu0 0
    %986 = vmatpush1.bf16.msra.mxu0 %v969
    %987 = vmatprep.subr.bf16.mxu0 0
    %988 = vmatpush1.bf16.msra.mxu0 %v970
    %989 = vmatprep.subr.bf16.mxu0 0
    %990 = vmatpush1.bf16.msra.mxu0 %v971
    %991 = vmatprep.subr.bf16.mxu0 0
    %992 = vmatpush1.bf16.msra.mxu0 %v972
    %993 = vmatprep.subr.bf16.mxu0 0
    %994 = vmatpush1.bf16.msra.mxu0 %v973
    %995 = vmatprep.subr.bf16.mxu0 0
    %996 = vmatpush1.bf16.msra.mxu0 %v974
    %997 = vmatprep.subr.bf16.mxu0 0
    %998 = vmatpush1.bf16.msra.mxu0 %v975
    %999 = vmatprep.subr.bf16.mxu0 0
    %1000 = vmatpush1.bf16.msra.mxu0 %v976
    %1001 = vmatprep.subr.bf16.mxu0 0
    %1002 = vmatpush1.bf16.msra.mxu0 0
    %1003 = vmatprep.subr.bf16.mxu0 0
    %1004 = vmatpush1.bf16.msra.mxu0 0
    %1005 = vmatprep.subr.bf16.mxu0 0
    %1006 = vmatpush1.bf16.msra.mxu0 0
    %1007 = vmatprep.subr.bf16.mxu0 0
    %1008 = vmatpush1.bf16.msra.mxu0 0
    %1009 = vmatprep.subr.bf16.mxu0 0
    %1010 = vmatpush1.bf16.msra.mxu0 0
    %1011 = vmatprep.subr.bf16.mxu0 0
    %1012 = vmatpush1.bf16.msra.mxu0 0
    %1013 = vmatprep.subr.bf16.mxu0 0
    %1014 = vmatpush1.bf16.msra.mxu0 0
    %1015 = vmatprep.subr.bf16.mxu0 0
    %1016 = vmatpush1.bf16.msra.mxu0 0
    %1017 = vmatprep.mubr.bf16.mxu0 0
    %1018 = vmatmul.mubr.bf16.gmra.mrb[0].mxu0 %v920
    %v1019 = vpop.f32.mrb[0].mxu0
    %v1020 = vadd.f32 %v132, %v1019
    %v1021 = vpop.f32.mrb[0].mxu0
    %v1022 = vpop.f32.mrb[0].mxu0
    %v1023 = vpop.f32.mrb[0].mxu0
    %1024 = vdwg.mxu0
    %1025 = vst [vmem:[#allocation15] sm:$0xff] %v1020
    %v1026 = vld [vmem:[%s10] sm:$0x1]
    %v1027 = vmul.f32 %v1020, %v1020
    %1028 = vadd.xlane.f32.xlu0 %v1027
    %v1029 = vpop.xlane.xlu0 %1028
    %v1030 = vmul.f32 %v1029, %v137
    %v1031 = vadd.f32 %v1030, 1e-06
    %v1032 = vrsqrt.pop %v1031
    %v1033 = vmul.f32 %v1020, %v1032
    %v1035 = vlaneseq
    %v1036 = vshrl.u32 %v1035, 7
    %v1037 = vsub.s32 0, %v1036
    %v1038 = vrot.slane %v1026, %v1037
    %v1040 = vmul.f32 %v1033, %v1038
    %v1041 = vpack.c.bf16 %v1040, %v1040
    %v1042 = vld [vmem:[#allocation11] sm:$0xff]
    %v1043 = vld [vmem:[#allocation11 + $0x8] sm:$0xff]
    %v1044 = vld [vmem:[#allocation11 + $0x10] sm:$0xff]
    %v1045 = vld [vmem:[#allocation11 + $0x18] sm:$0xff]
    %v1046 = vld [vmem:[#allocation11 + $0x20] sm:$0xff]
    %v1047 = vld [vmem:[#allocation11 + $0x28] sm:$0xff]
    %v1048 = vld [vmem:[#allocation11 + $0x30] sm:$0xff]
    %v1049 = vld [vmem:[#allocation11 + $0x38] sm:$0xff]
    %v1050 = vld [vmem:[#allocation11 + $0x40] sm:$0xff]
    %v1051 = vld [vmem:[#allocation11 + $0x48] sm:$0xff]
    %v1052 = vld [vmem:[#allocation11 + $0x50] sm:$0xff]
    %v1053 = vld [vmem:[#allocation11 + $0x58] sm:$0xff]
    %v1054 = vld [vmem:[#allocation11 + $0x60] sm:$0xff]
    %v1055 = vld [vmem:[#allocation11 + $0x68] sm:$0xff]
    %v1056 = vld [vmem:[#allocation11 + $0x70] sm:$0xff]
    %v1057 = vld [vmem:[#allocation11 + $0x78] sm:$0xff]
    %v1058 = vld [vmem:[#allocation11 + $0x80] sm:$0xff]
    %v1059 = vld [vmem:[#allocation11 + $0x88] sm:$0xff]
    %v1060 = vld [vmem:[#allocation11 + $0x90] sm:$0xff]
    %v1061 = vld [vmem:[#allocation11 + $0x98] sm:$0xff]
    %v1062 = vld [vmem:[#allocation11 + $0xa0] sm:$0xff]
    %v1063 = vld [vmem:[#allocation11 + $0xa8] sm:$0xff]
    %v1064 = vld [vmem:[#allocation11 + $0xb0] sm:$0xff]
    %v1065 = vld [vmem:[#allocation11 + $0xb8] sm:$0xff]
    %v1066 = vld [vmem:[#allocation11 + $0xc0] sm:$0xff]
    %v1067 = vld [vmem:[#allocation11 + $0xc8] sm:$0xff]
    %v1068 = vld [vmem:[#allocation11 + $0xd0] sm:$0xff]
    %v1069 = vld [vmem:[#allocation11 + $0xd8] sm:$0xff]
    %v1070 = vld [vmem:[#allocation11 + $0xe0] sm:$0xff]
    %v1071 = vld [vmem:[#allocation11 + $0xe8] sm:$0xff]
    %v1072 = vld [vmem:[#allocation11 + $0xf0] sm:$0xff]
    %v1073 = vld [vmem:[#allocation11 + $0xf8] sm:$0xff]
    %v1106 = vunpack.c.l.b16 %v1042
    %v1107 = vunpack.c.h.b16 %v1042
    %v1108 = vunpack.c.l.b16 %v1043
    %v1109 = vunpack.c.h.b16 %v1043
    %v1110 = vunpack.c.l.b16 %v1044
    %v1111 = vunpack.c.h.b16 %v1044
    %v1112 = vunpack.c.l.b16 %v1045
    %v1113 = vunpack.c.h.b16 %v1045
    %v1114 = vunpack.c.l.b16 %v1046
    %v1115 = vunpack.c.h.b16 %v1046
    %v1116 = vunpack.c.l.b16 %v1047
    %v1117 = vunpack.c.h.b16 %v1047
    %v1118 = vunpack.c.l.b16 %v1048
    %v1119 = vunpack.c.h.b16 %v1048
    %v1120 = vunpack.c.l.b16 %v1049
    %v1121 = vunpack.c.h.b16 %v1049
    %v1122 = vunpack.c.l.b16 %v1050
    %v1123 = vunpack.c.h.b16 %v1050
    %v1124 = vunpack.c.l.b16 %v1051
    %v1125 = vunpack.c.h.b16 %v1051
    %v1126 = vunpack.c.l.b16 %v1052
    %v1127 = vunpack.c.h.b16 %v1052
    %v1128 = vunpack.c.l.b16 %v1053
    %v1129 = vunpack.c.h.b16 %v1053
    %v1130 = vunpack.c.l.b16 %v1054
    %v1131 = vunpack.c.h.b16 %v1054
    %v1132 = vunpack.c.l.b16 %v1055
    %v1133 = vunpack.c.h.b16 %v1055
    %v1134 = vunpack.c.l.b16 %v1056
    %v1135 = vunpack.c.h.b16 %v1056
    %v1136 = vunpack.c.l.b16 %v1057
    %v1137 = vunpack.c.h.b16 %v1057
    %v1138 = vunpack.c.l.b16 %v1058
    %v1139 = vunpack.c.h.b16 %v1058
    %v1140 = vunpack.c.l.b16 %v1059
    %v1141 = vunpack.c.h.b16 %v1059
    %v1142 = vunpack.c.l.b16 %v1060
    %v1143 = vunpack.c.h.b16 %v1060
    %v1144 = vunpack.c.l.b16 %v1061
    %v1145 = vunpack.c.h.b16 %v1061
    %v1146 = vunpack.c.l.b16 %v1062
    %v1147 = vunpack.c.h.b16 %v1062
    %v1148 = vunpack.c.l.b16 %v1063
    %v1149 = vunpack.c.h.b16 %v1063
    %v1150 = vunpack.c.l.b16 %v1064
    %v1151 = vunpack.c.h.b16 %v1064
    %v1152 = vunpack.c.l.b16 %v1065
    %v1153 = vunpack.c.h.b16 %v1065
    %v1154 = vunpack.c.l.b16 %v1066
    %v1155 = vunpack.c.h.b16 %v1066
    %v1156 = vunpack.c.l.b16 %v1067
    %v1157 = vunpack.c.h.b16 %v1067
    %v1158 = vunpack.c.l.b16 %v1068
    %v1159 = vunpack.c.h.b16 %v1068
    %v1160 = vunpack.c.l.b16 %v1069
    %v1161 = vunpack.c.h.b16 %v1069
    %v1162 = vunpack.c.l.b16 %v1070
    %v1163 = vunpack.c.h.b16 %v1070
    %v1164 = vunpack.c.l.b16 %v1071
    %v1165 = vunpack.c.h.b16 %v1071
    %v1166 = vunpack.c.l.b16 %v1072
    %v1167 = vunpack.c.h.b16 %v1072
    %v1168 = vunpack.c.l.b16 %v1073
    %v1169 = vunpack.c.h.b16 %v1073
    %v1170 = vpack.c.b16 %v1110, %v1106
    %v1171 = vpack.c.b16 %v1111, %v1107
    %v1172 = vpack.c.b16 %v1112, %v1108
    %v1173 = vpack.c.b16 %v1113, %v1109
    %v1174 = vpack.c.b16 %v1118, %v1114
    %v1175 = vpack.c.b16 %v1119, %v1115
    %v1176 = vpack.c.b16 %v1120, %v1116
    %v1177 = vpack.c.b16 %v1121, %v1117
    %v1178 = vpack.c.b16 %v1126, %v1122
    %v1179 = vpack.c.b16 %v1127, %v1123
    %v1180 = vpack.c.b16 %v1128, %v1124
    %v1181 = vpack.c.b16 %v1129, %v1125
    %v1182 = vpack.c.b16 %v1134, %v1130
    %v1183 = vpack.c.b16 %v1135, %v1131
    %v1184 = vpack.c.b16 %v1136, %v1132
    %v1185 = vpack.c.b16 %v1137, %v1133
    %v1186 = vpack.c.b16 %v1142, %v1138
    %v1187 = vpack.c.b16 %v1143, %v1139
    %v1188 = vpack.c.b16 %v1144, %v1140
    %v1189 = vpack.c.b16 %v1145, %v1141
    %v1190 = vpack.c.b16 %v1150, %v1146
    %v1191 = vpack.c.b16 %v1151, %v1147
    %v1192 = vpack.c.b16 %v1152, %v1148
    %v1193 = vpack.c.b16 %v1153, %v1149
    %v1194 = vpack.c.b16 %v1158, %v1154
    %v1195 = vpack.c.b16 %v1159, %v1155
    %v1196 = vpack.c.b16 %v1160, %v1156
    %v1197 = vpack.c.b16 %v1161, %v1157
    %v1198 = vpack.c.b16 %v1166, %v1162
    %v1199 = vpack.c.b16 %v1167, %v1163
    %v1200 = vpack.c.b16 %v1168, %v1164
    %v1201 = vpack.c.b16 %v1169, %v1165
    %1234 = vmatprep.subr.bf16.mxu0 %v1171
    %1235 = vmatpush1.bf16.msra.mxu0 %v1170
    %1236 = vmatprep.subr.bf16.mxu0 %v1175
    %1237 = vmatpush1.bf16.msra.mxu0 %v1174
    %1238 = vmatprep.subr.bf16.mxu0 %v1179
    %1239 = vmatpush1.bf16.msra.mxu0 %v1178
    %1240 = vmatprep.subr.bf16.mxu0 %v1183
    %1241 = vmatpush1.bf16.msra.mxu0 %v1182
    %1242 = vmatprep.subr.bf16.mxu0 %v1187
    %1243 = vmatpush1.bf16.msra.mxu0 %v1186
    %1244 = vmatprep.subr.bf16.mxu0 %v1191
    %1245 = vmatpush1.bf16.msra.mxu0 %v1190
    %1246 = vmatprep.subr.bf16.mxu0 %v1195
    %1247 = vmatpush1.bf16.msra.mxu0 %v1194
    %1248 = vmatprep.subr.bf16.mxu0 %v1199
    %1249 = vmatpush1.bf16.msra.mxu0 %v1198
    %1250 = vmatprep.subr.bf16.mxu0 0
    %1251 = vmatpush1.bf16.msra.mxu0 0
    %1252 = vmatprep.subr.bf16.mxu0 0
    %1253 = vmatpush1.bf16.msra.mxu0 0
    %1254 = vmatprep.subr.bf16.mxu0 0
    %1255 = vmatpush1.bf16.msra.mxu0 0
    %1256 = vmatprep.subr.bf16.mxu0 0
    %1257 = vmatpush1.bf16.msra.mxu0 0
    %1258 = vmatprep.subr.bf16.mxu0 0
    %1259 = vmatpush1.bf16.msra.mxu0 0
    %1260 = vmatprep.subr.bf16.mxu0 0
    %1261 = vmatpush1.bf16.msra.mxu0 0
    %1262 = vmatprep.subr.bf16.mxu0 0
    %1263 = vmatpush1.bf16.msra.mxu0 0
    %1264 = vmatprep.subr.bf16.mxu0 0
    %1265 = vmatpush1.bf16.msra.mxu0 0
    %1266 = vmatprep.mubr.bf16.mxu0 0
    %1267 = vmatmul.mubr.bf16.gmra.mrb[0].mxu0 %v1041
    %v1268 = vpop.f32.mrb[0].mxu0
    %v1269 = vadd.f32 0.0, %v1268
    %v1270 = vpop.f32.mrb[0].mxu0
    %v1271 = vadd.f32 0.0, %v1270
    %v1272 = vpop.f32.mrb[0].mxu0
    %v1273 = vpop.f32.mrb[0].mxu0
    %1274 = vdwg.mxu0
    %1275 = vmatprep.subr.bf16.mxu0 %v1173
    %1276 = vmatpush1.bf16.msra.mxu0 %v1172
    %1277 = vmatprep.subr.bf16.mxu0 %v1177
    %1278 = vmatpush1.bf16.msra.mxu0 %v1176
    %1279 = vmatprep.subr.bf16.mxu0 %v1181
    %1280 = vmatpush1.bf16.msra.mxu0 %v1180
    %1281 = vmatprep.subr.bf16.mxu0 %v1185
    %1282 = vmatpush1.bf16.msra.mxu0 %v1184
    %1283 = vmatprep.subr.bf16.mxu0 %v1189
    %1284 = vmatpush1.bf16.msra.mxu0 %v1188
    %1285 = vmatprep.subr.bf16.mxu0 %v1193
    %1286 = vmatpush1.bf16.msra.mxu0 %v1192
    %1287 = vmatprep.subr.bf16.mxu0 %v1197
    %1288 = vmatpush1.bf16.msra.mxu0 %v1196
    %1289 = vmatprep.subr.bf16.mxu0 %v1201
    %1290 = vmatpush1.bf16.msra.mxu0 %v1200
    %1291 = vmatprep.subr.bf16.mxu0 0
    %1292 = vmatpush1.bf16.msra.mxu0 0
    %1293 = vmatprep.subr.bf16.mxu0 0
    %1294 = vmatpush1.bf16.msra.mxu0 0
    %1295 = vmatprep.subr.bf16.mxu0 0
    %1296 = vmatpush1.bf16.msra.mxu0 0
    %1297 = vmatprep.subr.bf16.mxu0 0
    %1298 = vmatpush1.bf16.msra.mxu0 0
    %1299 = vmatprep.subr.bf16.mxu0 0
    %1300 = vmatpush1.bf16.msra.mxu0 0
    %1301 = vmatprep.subr.bf16.mxu0 0
    %1302 = vmatpush1.bf16.msra.mxu0 0
    %1303 = vmatprep.subr.bf16.mxu0 0
    %1304 = vmatpush1.bf16.msra.mxu0 0
    %1305 = vmatprep.subr.bf16.mxu0 0
    %1306 = vmatpush1.bf16.msra.mxu0 0
    %1307 = vmatprep.mubr.bf16.mxu0 0
    %1308 = vmatmul.mubr.bf16.gmra.mrb[0].mxu0 %v1041
    %v1309 = vpop.f32.mrb[0].mxu0
    %v1310 = vadd.f32 0.0, %v1309
    %v1311 = vpop.f32.mrb[0].mxu0
    %v1312 = vadd.f32 0.0, %v1311
    %v1313 = vpop.f32.mrb[0].mxu0
    %v1314 = vpop.f32.mrb[0].mxu0
    %1315 = vdwg.mxu0
    %v1316 = vxor.u32 %v1269, 2147483648
    %v1317 = vxor.u32 %v1271, 2147483648
    %v1318 = vmul.f32 %v1316, 1.442695
    %v1319 = vpow.pop %v1318
    %v1320 = vmul.f32 %v1317, 1.442695
    %v1321 = vpow.pop %v1320
    %v1322 = vadd.f32 %v1319, 1.0
    %v1323 = vadd.f32 %v1321, 1.0
    %v1324 = vrcp.pop %v1322
    %v1325 = vmul.f32 1.0, %v1324
    %v1326 = vrcp.pop %v1323
    %v1327 = vmul.f32 1.0, %v1326
    %v1328 = vmul.f32 %v1269, %v1325
    %v1329 = vmul.f32 %v1271, %v1327
    %v1330 = vmul.f32 %v1328, %v1310
    %v1331 = vmul.f32 %v1329, %v1312
    %v1332 = vpack.c.bf16 %v1330, %v1330
    %v1333 = vpack.c.bf16 %v1331, %v1331
    %v1334 = vld [vmem:[#allocation13] sm:$0xf]
    %v1335 = vld [vmem:[#allocation13 + $0x4] sm:$0xf]
    %v1336 = vld [vmem:[#allocation13 + $0x8] sm:$0xf]
    %v1337 = vld [vmem:[#allocation13 + $0xc] sm:$0xf]
    %v1338 = vld [vmem:[#allocation13 + $0x10] sm:$0xf]
    %v1339 = vld [vmem:[#allocation13 + $0x14] sm:$0xf]
    %v1340 = vld [vmem:[#allocation13 + $0x18] sm:$0xf]
    %v1341 = vld [vmem:[#allocation13 + $0x1c] sm:$0xf]
    %v1342 = vld [vmem:[#allocation13 + $0x20] sm:$0xf]
    %v1343 = vld [vmem:[#allocation13 + $0x24] sm:$0xf]
    %v1344 = vld [vmem:[#allocation13 + $0x28] sm:$0xf]
    %v1345 = vld [vmem:[#allocation13 + $0x2c] sm:$0xf]
    %v1346 = vld [vmem:[#allocation13 + $0x30] sm:$0xf]
    %v1347 = vld [vmem:[#allocation13 + $0x34] sm:$0xf]
    %v1348 = vld [vmem:[#allocation13 + $0x38] sm:$0xf]
    %v1349 = vld [vmem:[#allocation13 + $0x3c] sm:$0xf]
    %v1350 = vld [vmem:[#allocation13 + $0x40] sm:$0xf]
    %v1351 = vld [vmem:[#allocation13 + $0x44] sm:$0xf]
    %v1352 = vld [vmem:[#allocation13 + $0x48] sm:$0xf]
    %v1353 = vld [vmem:[#allocation13 + $0x4c] sm:$0xf]
    %v1354 = vld [vmem:[#allocation13 + $0x50] sm:$0xf]
    %v1355 = vld [vmem:[#allocation13 + $0x54] sm:$0xf]
    %v1356 = vld [vmem:[#allocation13 + $0x58] sm:$0xf]
    %v1357 = vld [vmem:[#allocation13 + $0x5c] sm:$0xf]
    %v1358 = vld [vmem:[#allocation13 + $0x60] sm:$0xf]
    %v1359 = vld [vmem:[#allocation13 + $0x64] sm:$0xf]
    %v1360 = vld [vmem:[#allocation13 + $0x68] sm:$0xf]
    %v1361 = vld [vmem:[#allocation13 + $0x6c] sm:$0xf]
    %v1362 = vld [vmem:[#allocation13 + $0x70] sm:$0xf]
    %v1363 = vld [vmem:[#allocation13 + $0x74] sm:$0xf]
    %v1364 = vld [vmem:[#allocation13 + $0x78] sm:$0xf]
    %v1365 = vld [vmem:[#allocation13 + $0x7c] sm:$0xf]
    %v1398 = vunpack.c.l.b16 %v1334
    %v1399 = vunpack.c.l.b16 %v1335
    %v1400 = vunpack.c.l.b16 %v1336
    %v1401 = vunpack.c.l.b16 %v1337
    %v1402 = vunpack.c.l.b16 %v1338
    %v1403 = vunpack.c.l.b16 %v1339
    %v1404 = vunpack.c.l.b16 %v1340
    %v1405 = vunpack.c.l.b16 %v1341
    %v1406 = vunpack.c.l.b16 %v1342
    %v1407 = vunpack.c.l.b16 %v1343
    %v1408 = vunpack.c.l.b16 %v1344
    %v1409 = vunpack.c.l.b16 %v1345
    %v1410 = vunpack.c.l.b16 %v1346
    %v1411 = vunpack.c.l.b16 %v1347
    %v1412 = vunpack.c.l.b16 %v1348
    %v1413 = vunpack.c.l.b16 %v1349
    %v1414 = vunpack.c.l.b16 %v1350
    %v1415 = vunpack.c.l.b16 %v1351
    %v1416 = vunpack.c.l.b16 %v1352
    %v1417 = vunpack.c.l.b16 %v1353
    %v1418 = vunpack.c.l.b16 %v1354
    %v1419 = vunpack.c.l.b16 %v1355
    %v1420 = vunpack.c.l.b16 %v1356
    %v1421 = vunpack.c.l.b16 %v1357
    %v1422 = vunpack.c.l.b16 %v1358
    %v1423 = vunpack.c.l.b16 %v1359
    %v1424 = vunpack.c.l.b16 %v1360
    %v1425 = vunpack.c.l.b16 %v1361
    %v1426 = vunpack.c.l.b16 %v1362
    %v1427 = vunpack.c.l.b16 %v1363
    %v1428 = vunpack.c.l.b16 %v1364
    %v1429 = vunpack.c.l.b16 %v1365
    %v1430 = vpack.c.b16 %v1399, %v1398
    %v1431 = vpack.c.b16 %v1401, %v1400
    %v1432 = vpack.c.b16 %v1403, %v1402
    %v1433 = vpack.c.b16 %v1405, %v1404
    %v1434 = vpack.c.b16 %v1407, %v1406
    %v1435 = vpack.c.b16 %v1409, %v1408
    %v1436 = vpack.c.b16 %v1411, %v1410
    %v1437 = vpack.c.b16 %v1413, %v1412
    %v1438 = vpack.c.b16 %v1415, %v1414
    %v1439 = vpack.c.b16 %v1417, %v1416
    %v1440 = vpack.c.b16 %v1419, %v1418
    %v1441 = vpack.c.b16 %v1421, %v1420
    %v1442 = vpack.c.b16 %v1423, %v1422
    %v1443 = vpack.c.b16 %v1425, %v1424
    %v1444 = vpack.c.b16 %v1427, %v1426
    %v1445 = vpack.c.b16 %v1429, %v1428
    %1462 = vmatprep.subr.bf16.mxu0 0
    %1463 = vmatpush1.bf16.msra.mxu0 %v1430
    %1464 = vmatprep.subr.bf16.mxu0 0
    %1465 = vmatpush1.bf16.msra.mxu0 %v1431
    %1466 = vmatprep.subr.bf16.mxu0 0
    %1467 = vmatpush1.bf16.msra.mxu0 %v1432
    %1468 = vmatprep.subr.bf16.mxu0 0
    %1469 = vmatpush1.bf16.msra.mxu0 %v1433
    %1470 = vmatprep.subr.bf16.mxu0 0
    %1471 = vmatpush1.bf16.msra.mxu0 %v1434
    %1472 = vmatprep.subr.bf16.mxu0 0
    %1473 = vmatpush1.bf16.msra.mxu0 %v1435
    %1474 = vmatprep.subr.bf16.mxu0 0
    %1475 = vmatpush1.bf16.msra.mxu0 %v1436
    %1476 = vmatprep.subr.bf16.mxu0 0
    %1477 = vmatpush1.bf16.msra.mxu0 %v1437
    %1478 = vmatprep.subr.bf16.mxu0 0
    %1479 = vmatpush1.bf16.msra.mxu0 %v1438
    %1480 = vmatprep.subr.bf16.mxu0 0
    %1481 = vmatpush1.bf16.msra.mxu0 %v1439
    %1482 = vmatprep.subr.bf16.mxu0 0
    %1483 = vmatpush1.bf16.msra.mxu0 %v1440
    %1484 = vmatprep.subr.bf16.mxu0 0
    %1485 = vmatpush1.bf16.msra.mxu0 %v1441
    %1486 = vmatprep.subr.bf16.mxu0 0
    %1487 = vmatpush1.bf16.msra.mxu0 %v1442
    %1488 = vmatprep.subr.bf16.mxu0 0
    %1489 = vmatpush1.bf16.msra.mxu0 %v1443
    %1490 = vmatprep.subr.bf16.mxu0 0
    %1491 = vmatpush1.bf16.msra.mxu0 %v1444
    %1492 = vmatprep.subr.bf16.mxu0 0
    %1493 = vmatpush1.bf16.msra.mxu0 %v1445
    %1494 = vmatprep.mubr.bf16.mxu0 %v1333
    %1495 = vmatmul.mubr.bf16.gmra.mrb[0].mxu0 %v1332
    %v1496 = vpop.f32.mrb[0].mxu0
    %v1497 = vadd.f32 0.0, %v1496
    %v1498 = vpop.f32.mrb[0].mxu0
    %v1499 = vpop.f32.mrb[0].mxu0
    %v1500 = vpop.f32.mrb[0].mxu0
    %1501 = vdwg.mxu0
    %v1502 = vpack.c.bf16 %v1497, %v1497
    %1503 = vst [vmem:[#allocation14] sm:$0xf] %v1502
    // Predicated region
    $region74: #{tpu_custom_call.1} parent=1 // pred_check
      _
    $region75: #{tpu_custom_call.1} parent=1 // pred_check_branch
      %1505 = sbr.rel (0) target = $region77
    $region76: #{tpu_custom_call.1} parent=1 // pred_region
      %s1507 = ssub.s32 64, 64
      %1508 = vsyncadd [#allocation4], %s1507
      %s1510 = sshll.u32 [#allocation14], 4
      %s1511 = int_to_ptr.vmem [resolvable:$true] %s1510
      %1513 = dma.vmem_to_hbm [thread:$0]  %s1511, 64, %s11, [#allocation4]
    $region77: #{tpu_custom_call.1} parent=1 // pred_fallthru
      _
    // Predicated region
    $region78: #{tpu_custom_call.1} parent=1 // pred_check
      _
    $region79: #{tpu_custom_call.1} parent=1 // pred_check_branch
      %1515 = sbr.rel (0) target = $region81
    $region80: #{tpu_custom_call.1} parent=1 // pred_region
      %s1517 = ssub.s32 128, 128
      %1518 = vsyncadd [#allocation16], %s1517
      %s1520 = sshll.u32 [#allocation15], 4
      %s1521 = int_to_ptr.vmem [resolvable:$true] %s1520
      %1523 = dma.vmem_to_hbm [thread:$0]  %s1521, 128, %s12, [#allocation16]
    $region81: #{tpu_custom_call.1} parent=1 // pred_fallthru
      _
    // Predicated region
    $region82: #{tpu_custom_call.1} parent=1 // pred_check
      _
    $region83: #{tpu_custom_call.1} parent=1 // pred_check_branch
      %1525 = sbr.rel (0) target = $region85
    $region84: #{tpu_custom_call.1} parent=1 // pred_region
      %1526 = dma.done [#allocation4], 64
    $region85: #{tpu_custom_call.1} parent=1 // pred_fallthru
      _
    // Predicated region
    $region86: #{tpu_custom_call.1} parent=1 // pred_check
      _
    $region87: #{tpu_custom_call.1} parent=1 // pred_check_branch
      %1528 = sbr.rel (0) target = $region89
    $region88: #{tpu_custom_call.1} parent=1 // pred_region
      %1529 = dma.done [#allocation16], 128
    $region89: #{tpu_custom_call.1} parent=1 // pred_fallthru
      _
    %1530 = vsyncpa [#allocation3], 1
    %1531 = vsyncpa [#allocation6], 1
    %1532 = vsyncpa [#allocation9], 1
    %1533 = vsyncpa [#allocation12], 1
    %1534 = vsyncpa [#allocation4], 1
    %1535 = vsyncpa [#allocation16], 1

</llo_original>
